<compile_context>
chip_gen: v7x
topology: tpu7x:2x2x1
jax: 0.10.0
libtpu: 0.0.40
codegen_flags: <defaults>
</compile_context>

<pallas_src>
import numpy as np
import jax
import jax.numpy as jnp
from jax.experimental import pallas as pl
from jax.experimental.pallas import tpu as pltpu

# ----------------------------- config ---------------------------------------
NGF = 32
LATENT = 16
LABEL = 8
SUB_RES = 16
BATCH = 2
C0 = LATENT + LABEL  # 24

_SHIFTS = ((0, 0), (0, 1), (1, 0), (1, 1))


# ---------------- shape-only selection / permutation constants ---------------
def _shift_matrix(batch, h, w, di, dj):
    """S @ a_flat -> a[b, i+di, j+dj] on NHWC-flat rows, zero past the border."""
    m = batch * h * w
    s = np.zeros((m, m), np.float32)
    for b in range(batch):
        for i in range(h - di):
            for j in range(w - dj):
                s[b * h * w + i * w + j,
                  b * h * w + (i + di) * w + (j + dj)] = 1.0
    return s


def _gather_matrix(batch, h, w):
    """Vertical stack [identity, right, down, down-right]: (4*M, M)."""
    return np.concatenate(
        [_shift_matrix(batch, h, w, di, dj) for di, dj in _SHIFTS], axis=0)


def _phase_to_flat(batch, hi, wi):
    """P with act_flat = P @ stacked_phases for the 2x upsampled grid."""
    ho, wo = 2 * hi, 2 * wi
    m_in = batch * hi * wi
    p = np.zeros((batch * ho * wo, 4 * m_in), np.float32)
    for b in range(batch):
        for y in range(ho):
            for x in range(wo):
                i, dy = divmod(y, 2)
                j, dx = divmod(x, 2)
                ph = 2 * dy + dx
                p[b * ho * wo + y * wo + x,
                  ph * m_in + b * hi * wi + i * wi + j] = 1.0
    return p


def _a1_selector(batch):
    """T (4*B*16, 16) and bidx (4*B*16,) such that the block-0 input with the
    block-1 shifted-copy gather folded in is
        a1[r, s*C0 + ci] = T[r, s] * x0[bidx[r], ci]."""
    n = batch * 16
    t = np.zeros((4 * n, 16), np.float32)
    bidx = np.zeros((4 * n,), np.int32)
    for q, (di, dj) in enumerate(_SHIFTS):
        for b in range(batch):
            for i in range(4):
                for j in range(4):
                    r = q * n + b * 16 + i * 4 + j
                    bidx[r] = b
                    si, sj = i + di, j + dj
                    if si < 4 and sj < 4:
                        t[r, si * 4 + sj] = 1.0
    return t, bidx


# ---------------- parameter preparation (runs once, outside the jit) ---------
def _block_weights(w, wsc):
    """(4, 4, C, C) [input-shift q, output-parity p] sub-pixel weights for a
    stride-2 ConvTranspose(3x3, pad=1, out_pad=1) + stride-2 1x1 shortcut."""
    c = w.shape[0]
    z = jnp.zeros((c, c), w.dtype)
    w_ = lambda ky, kx: w[:, :, ky, kx]
    rows = [
        [w_(1, 1) + wsc[:, :, 0, 0], w_(1, 2), w_(2, 1), w_(2, 2)],  # a[i, j]
        [z,                          w_(1, 0), z,        w_(2, 0)],  # a[i, j+1]
        [z,                          z,        w_(0, 1), w_(0, 2)],  # a[i+1, j]
        [z,                          z,        z,        w_(0, 0)],  # a[i+1, j+1]
    ]
    return jnp.stack([jnp.stack(r, axis=0) for r in rows], axis=0)


def prepare_params(params, batch=BATCH, dtype=jnp.bfloat16):
    c = NGF
    c0 = params["b0_w"].shape[0]

    # block-0 weight, rows indexed (spatial tap s, ci) -> (16*C0, C)
    w0f = params["b0_w"].transpose(2, 3, 0, 1).reshape(16 * c0, c)

    # residual-block sub-pixel weights, phases stacked along lanes: (4, C, 4C)
    w1 = _block_weights(params["b1_w"], params["b1_sc"])
    w2 = _block_weights(params["b2_w"], params["b2_sc"])
    w1_wide = w1.transpose(0, 2, 1, 3).reshape(4, c, 4 * c)
    w2_wide = w2.transpose(0, 2, 1, 3).reshape(4, c, 4 * c)

    # out layer: per-phase 1x1 conv (block-diagonal), zero-padded lane-dense.
    wo = params["out_w"][:, :, 0, 0]                                  # (C, 3)
    wo_bd = jnp.kron(jnp.eye(4, dtype=wo.dtype), wo)                  # (4C, 12)
    wo_pad = jnp.zeros((4 * c, 128), wo.dtype).at[:, :12].set(wo_bd)  # (4C, 128)

    # 0/1 constants: block-0/1 input-gather selector (folded into `a1` in the
    # wrapper) and the (phase->8x8 interleave) o (shifted copies) matrix for
    # block 2, kept as ONE (512, 128) selection-matmul operand (K=128).
    sel, bidx = _a1_selector(batch)
    gp2 = jnp.asarray(
        _gather_matrix(batch, 8, 8) @ _phase_to_flat(batch, 4, 4))    # (512, 128)

    return {
        "embed": params["embed"],
        "sel": jnp.asarray(sel),
        "bidx": jnp.asarray(bidx),
        "w0f": w0f.astype(dtype),
        "w1_wide": w1_wide.astype(dtype),
        "gp2": gp2.astype(dtype),
        "w2_wide": w2_wide.astype(dtype),
        "wo_pad": wo_pad.astype(dtype),
    }


# ---------------------------- fused Pallas kernel ----------------------------
def _generator_kernel(a1_ref, w0_ref, w1_ref, gp2_ref, w2_ref, wo_ref, out_ref):
    bf16 = jnp.bfloat16
    c = w0_ref.shape[1]                 # 32 channels
    m4 = a1_ref.shape[0] // 4           # B*16 rows of the 4x4 grid (32)
    m8 = gp2_ref.shape[0] // 4          # B*64 rows of the 8x8 grid (128)

    def mm(a, b):
        return jnp.dot(a, b, preferred_element_type=jnp.float32)

    # block 0 (ConvT k=4 on the 1x1 latent) fused with block-1's shifted-copy
    # gather: ONE well-filled (128, 384) @ (384, 32) dot + ReLU.
    x1s = jnp.maximum(mm(a1_ref[...], w0_ref[...]), 0.0).astype(bf16)   # (128, 32)

    # block 1: 4 accumulating dots, all 4 output parities along lanes (N=128).
    acc1 = mm(x1s[0:m4, :], w1_ref[0])
    for q in range(1, 4):
        acc1 = acc1 + mm(x1s[m4 * q:m4 * (q + 1), :], w1_ref[q])
    y1 = jnp.maximum(acc1, 0.0).astype(bf16)                            # (32, 128)

    # phase-major row stack (static lane slices + sublane concat) so the
    # interleave/gather stage is one K=128 selection matmul.
    y1_stk = jnp.concatenate([y1[:, c * p:c * (p + 1)] for p in range(4)],
                             axis=0)                                    # (128, 32)

    # interleave block-1 phases onto the 8x8 grid + gather block-2's shifted
    # copies: ONE (512, 128) @ (128, 32) selection dot (exact 0/1 copies).
    x2s = mm(gp2_ref[...], y1_stk).astype(bf16)                         # (512, 32)

    # block 2: 4 accumulating dots, output parities along lanes (N=128).
    acc2 = mm(x2s[0:m8, :], w2_ref[0])
    for q in range(1, 4):
        acc2 = acc2 + mm(x2s[m8 * q:m8 * (q + 1), :], w2_ref[q])
    y2 = jnp.maximum(acc2, 0.0).astype(bf16)                            # (128, 128)

    # out layer: per-phase 1x1 conv (block-diag weight, zero-padded to 128
    # lanes) + tanh on the f32 accumulator; lane-dense (128, 128) store.
    out_ref[...] = jnp.tanh(mm(y2, wo_ref[...]))                        # (128, 128)


def _full_spec(shape):
    zeros = (0,) * len(shape)
    return pl.BlockSpec(tuple(shape), lambda i: zeros)


@jax.jit
def generator_forward(prepped, z, label):
    b = z.shape[0]
    assert prepped["sel"].shape[0] == 4 * b * 16, (
        "prepare_params was built for a different batch size")

    # TODO(synk): embedding gather, the (tiny) block-0 input expansion and the
    # final phase->NCHW layout shuffle stay in XLA; they are pure data movement
    # with no Pallas win at this size.
    emb = prepped["embed"][label]                                       # (B, LABEL)
    x0 = jnp.concatenate([z.reshape(b, -1), emb], axis=1)               # (B, 24)

    # block-0 input with the block-1 shifted-copy gather folded in:
    #   a1[r, s*C0 + ci] = sel[r, s] * x0[bidx[r], ci]
    a1 = (prepped["sel"][:, :, None] * x0[prepped["bidx"]][:, None, :]
          ).reshape(4 * b * 16, 16 * x0.shape[1]).astype(prepped["w0f"].dtype)

    operands = (a1, prepped["w0f"], prepped["w1_wide"], prepped["gp2"],
                prepped["w2_wide"], prepped["wo_pad"])

    c = NGF
    flops = 2 * ((4 * b * 16) * (16 * C0) * c          # block 0 + gather
                 + 4 * (b * 16) * c * (4 * c)          # block 1
                 + (4 * b * 64) * (4 * b * 16) * c     # interleave/gather
                 + 4 * (b * 64) * c * (4 * c)          # block 2
                 + (b * 64) * (4 * c) * 128)           # out layer
    bytes_accessed = int(sum(int(np.prod(op.shape)) * op.dtype.itemsize
                             for op in operands)) + b * 64 * 128 * 4

    res = pl.pallas_call(
        _generator_kernel,
        out_shape=jax.ShapeDtypeStruct((b * 64, 128), jnp.float32),
        grid=(1,),
        in_specs=[_full_spec(op.shape) for op in operands],
        out_specs=_full_spec((b * 64, 128)),
        compiler_params=pltpu.CompilerParams(
            dimension_semantics=("arbitrary",)),
        cost_estimate=pl.CostEstimate(
            flops=int(flops),
            transcendentals=int(b * 64 * 128),
            bytes_accessed=bytes_accessed),
    )(*operands)

    # (B*8*8, 4*3) phase layout (first 12 lanes) -> NCHW (B, 3, 16, 16).
    out = res[:, :12].reshape(b, 8, 8, 2, 2, 3).transpose(0, 5, 1, 3, 2, 4)
    return out.reshape(b, 3, 16, 16)


# ----------------------------- parameters ------------------------------------
def init_params(key):
    std = 0.05
    ks = jax.random.split(key, 7)
    return {
        "embed": jax.random.normal(ks[0], (LABEL, LABEL), jnp.float32) * std,
        "b0_w": jax.random.normal(ks[1], (C0, NGF, 4, 4), jnp.float32) * std,
        "b1_w": jax.random.normal(ks[2], (NGF, NGF, 3, 3), jnp.float32) * std,
        "b1_sc": jax.random.normal(ks[3], (NGF, NGF, 1, 1), jnp.float32) * std,
        "b2_w": jax.random.normal(ks[4], (NGF, NGF, 3, 3), jnp.float32) * std,
        "b2_sc": jax.random.normal(ks[5], (NGF, NGF, 1, 1), jnp.float32) * std,
        "out_w": jax.random.normal(ks[6], (NGF, 3, 1, 1), jnp.float32) * std,
    }


# ----------------------------- pure-JAX reference -----------------------------
def ref_conv_transpose(x, w, stride, padding, output_padding):
    """Direct scatter implementation of torch.nn.ConvTranspose2d (bias=False)."""
    B, cin, H, W = x.shape
    _, cout, kh, kw = w.shape
    Ho = (H - 1) * stride - 2 * padding + kh + output_padding
    Wo = (W - 1) * stride - 2 * padding + kw + output_padding
    Sfh = (H - 1) * stride + kh + output_padding
    Sfw = (W - 1) * stride + kw + output_padding
    out = jnp.zeros((B, cout, Sfh, Sfw), jnp.float32)
    for ky in range(kh):
        for kx in range(kw):
            contrib = jnp.einsum("bchw,cd->bdhw", x, w[:, :, ky, kx],
                                 precision=jax.lax.Precision.HIGHEST)
            out = out.at[:, :,
                         ky:ky + stride * (H - 1) + 1:stride,
                         kx:kx + stride * (W - 1) + 1:stride].add(contrib)
    return out[:, :, padding:padding + Ho, padding:padding + Wo]


def ref_forward(params, z, label):
    B = z.shape[0]
    emb = params["embed"][label].reshape(B, LABEL, 1, 1)
    x = jnp.concatenate([z, emb], axis=1)
    x = jnp.maximum(ref_conv_transpose(x, params["b0_w"], 1, 0, 0), 0.0)
    for wk, sck in (("b1_w", "b1_sc"), ("b2_w", "b2_sc")):
        main = ref_conv_transpose(x, params[wk], 2, 1, 1)
        sc = ref_conv_transpose(x, params[sck], 2, 0, 1)
        x = jnp.maximum(main + sc, 0.0)
    return jnp.tanh(ref_conv_transpose(x, params["out_w"], 1, 0, 0))


# ----------------------------- main -------------------------------------------
if __name__ == "__main__":
    key = jax.random.PRNGKey(0)
    pkey, zkey, lkey = jax.random.split(key, 3)
    params = init_params(pkey)
    prepped = prepare_params(params)

    z = jax.random.normal(zkey, (BATCH, LATENT, 1, 1), jnp.float32)
    label = jax.random.randint(lkey, (BATCH,), 0, LABEL)

    out = generator_forward(prepped, z, label)
    out = jax.block_until_ready(out)
    assert out.shape == (BATCH, 3, SUB_RES, SUB_RES), out.shape

    ref = ref_forward(params, z, label)
    # bf16 matmul operands (f32 accumulation) -> bf16-level tolerance.
    np.testing.assert_allclose(np.asarray(out), np.asarray(ref),
                               atol=2e-3, rtol=2e-2)
    print("KERNEL_OK")
</pallas_src>

<mosaic_0001>
module attributes {stable_mosaic.version = 11 : i64} {
  func.func @_generator_kernel(%arg0: i32, %arg1: memref<128x384xbf16, #tpu.memory_space<vmem>>, %arg2: memref<384x32xbf16, #tpu.memory_space<vmem>>, %arg3: memref<4x32x128xbf16, #tpu.memory_space<vmem>>, %arg4: memref<512x128xbf16, #tpu.memory_space<vmem>>, %arg5: memref<4x32x128xbf16, #tpu.memory_space<vmem>>, %arg6: memref<128x128xbf16, #tpu.memory_space<vmem>>, %arg7: memref<128x128xf32, #tpu.memory_space<vmem>>) attributes {dimension_semantics = [#tpu.dimension_semantics<arbitrary>], iteration_bounds = array<i64: 1>, scalar_prefetch = 0 : i64, scratch_operands = 0 : i64, tpu.core_type = #tpu.core_type<tc>, window_params = [{pipeline_mode = #tpu.pipeline_mode<synchronous>, transform_indices = @transform_0, window_bounds = array<i64: 128, 384>}, {pipeline_mode = #tpu.pipeline_mode<synchronous>, transform_indices = @transform_1, window_bounds = array<i64: 384, 32>}, {pipeline_mode = #tpu.pipeline_mode<synchronous>, transform_indices = @transform_2, window_bounds = array<i64: 4, 32, 128>}, {pipeline_mode = #tpu.pipeline_mode<synchronous>, transform_indices = @transform_3, window_bounds = array<i64: 512, 128>}, {pipeline_mode = #tpu.pipeline_mode<synchronous>, transform_indices = @transform_4, window_bounds = array<i64: 4, 32, 128>}, {pipeline_mode = #tpu.pipeline_mode<synchronous>, transform_indices = @transform_5, window_bounds = array<i64: 128, 128>}, {pipeline_mode = #tpu.pipeline_mode<synchronous>, transform_indices = @transform_6, window_bounds = array<i64: 128, 128>}]} {
    %c0 = arith.constant 0 : index
    %c0_0 = arith.constant 0 : index
    %0 = vector.load %arg1[%c0, %c0_0] : memref<128x384xbf16, #tpu.memory_space<vmem>>, vector<128x384xbf16>
    %c0_1 = arith.constant 0 : index
    %c0_2 = arith.constant 0 : index
    %1 = vector.load %arg2[%c0_1, %c0_2] : memref<384x32xbf16, #tpu.memory_space<vmem>>, vector<384x32xbf16>
    %cst = arith.constant dense<0.000000e+00> : vector<128x32xf32>
    %2 = tpu.matmul %0, %1, %cst {dimension_numbers = #tpu.dot_dimension_numbers<[1], [0], [0], [1], [0, 0, 1, 1], [], []>} : vector<128x384xbf16>, vector<384x32xbf16>, vector<128x32xf32> -> vector<128x32xf32>
    %cst_3 = arith.constant 0.000000e+00 : f32
    %3 = vector.broadcast %cst_3 : f32 to vector<128x32xf32>
    %4 = arith.maximumf %2, %3 : vector<128x32xf32>
    %5 = arith.truncf %4 : vector<128x32xf32> to vector<128x32xbf16>
    %6 = vector.extract_strided_slice %5 {offsets = [0, 0], sizes = [32, 32], strides = [1, 1]} : vector<128x32xbf16> to vector<32x32xbf16>
    %c0_4 = arith.constant 0 : index
    %c0_5 = arith.constant 0 : index
    %c0_6 = arith.constant 0 : index
    %7 = vector.load %arg3[%c0_4, %c0_5, %c0_6] : memref<4x32x128xbf16, #tpu.memory_space<vmem>>, vector<1x32x128xbf16>
    %8 = vector.shape_cast %7 : vector<1x32x128xbf16> to vector<32x128xbf16>
    %cst_7 = arith.constant dense<0.000000e+00> : vector<32x128xf32>
    %9 = tpu.matmul %6, %8, %cst_7 {dimension_numbers = #tpu.dot_dimension_numbers<[1], [0], [0], [1], [0, 0, 1, 1], [], []>} : vector<32x32xbf16>, vector<32x128xbf16>, vector<32x128xf32> -> vector<32x128xf32>
    %10 = vector.extract_strided_slice %5 {offsets = [32, 0], sizes = [32, 32], strides = [1, 1]} : vector<128x32xbf16> to vector<32x32xbf16>
    %c1 = arith.constant 1 : index
    %c0_8 = arith.constant 0 : index
    %c0_9 = arith.constant 0 : index
    %11 = vector.load %arg3[%c1, %c0_8, %c0_9] : memref<4x32x128xbf16, #tpu.memory_space<vmem>>, vector<1x32x128xbf16>
    %12 = vector.shape_cast %11 : vector<1x32x128xbf16> to vector<32x128xbf16>
    %cst_10 = arith.constant dense<0.000000e+00> : vector<32x128xf32>
    %13 = tpu.matmul %10, %12, %cst_10 {dimension_numbers = #tpu.dot_dimension_numbers<[1], [0], [0], [1], [0, 0, 1, 1], [], []>} : vector<32x32xbf16>, vector<32x128xbf16>, vector<32x128xf32> -> vector<32x128xf32>
    %14 = arith.addf %9, %13 : vector<32x128xf32>
    %15 = vector.extract_strided_slice %5 {offsets = [64, 0], sizes = [32, 32], strides = [1, 1]} : vector<128x32xbf16> to vector<32x32xbf16>
    %c2 = arith.constant 2 : index
    %c0_11 = arith.constant 0 : index
    %c0_12 = arith.constant 0 : index
    %16 = vector.load %arg3[%c2, %c0_11, %c0_12] : memref<4x32x128xbf16, #tpu.memory_space<vmem>>, vector<1x32x128xbf16>
    %17 = vector.shape_cast %16 : vector<1x32x128xbf16> to vector<32x128xbf16>
    %cst_13 = arith.constant dense<0.000000e+00> : vector<32x128xf32>
    %18 = tpu.matmul %15, %17, %cst_13 {dimension_numbers = #tpu.dot_dimension_numbers<[1], [0], [0], [1], [0, 0, 1, 1], [], []>} : vector<32x32xbf16>, vector<32x128xbf16>, vector<32x128xf32> -> vector<32x128xf32>
    %19 = arith.addf %14, %18 : vector<32x128xf32>
    %20 = vector.extract_strided_slice %5 {offsets = [96, 0], sizes = [32, 32], strides = [1, 1]} : vector<128x32xbf16> to vector<32x32xbf16>
    %c3 = arith.constant 3 : index
    %c0_14 = arith.constant 0 : index
    %c0_15 = arith.constant 0 : index
    %21 = vector.load %arg3[%c3, %c0_14, %c0_15] : memref<4x32x128xbf16, #tpu.memory_space<vmem>>, vector<1x32x128xbf16>
    %22 = vector.shape_cast %21 : vector<1x32x128xbf16> to vector<32x128xbf16>
    %cst_16 = arith.constant dense<0.000000e+00> : vector<32x128xf32>
    %23 = tpu.matmul %20, %22, %cst_16 {dimension_numbers = #tpu.dot_dimension_numbers<[1], [0], [0], [1], [0, 0, 1, 1], [], []>} : vector<32x32xbf16>, vector<32x128xbf16>, vector<32x128xf32> -> vector<32x128xf32>
    %24 = arith.addf %19, %23 : vector<32x128xf32>
    %cst_17 = arith.constant 0.000000e+00 : f32
    %25 = vector.broadcast %cst_17 : f32 to vector<32x128xf32>
    %26 = arith.maximumf %24, %25 : vector<32x128xf32>
    %27 = arith.truncf %26 : vector<32x128xf32> to vector<32x128xbf16>
    %28 = vector.extract_strided_slice %27 {offsets = [0, 0], sizes = [32, 32], strides = [1, 1]} : vector<32x128xbf16> to vector<32x32xbf16>
    %29 = vector.extract_strided_slice %27 {offsets = [0, 32], sizes = [32, 32], strides = [1, 1]} : vector<32x128xbf16> to vector<32x32xbf16>
    %30 = vector.extract_strided_slice %27 {offsets = [0, 64], sizes = [32, 32], strides = [1, 1]} : vector<32x128xbf16> to vector<32x32xbf16>
    %31 = vector.extract_strided_slice %27 {offsets = [0, 96], sizes = [32, 32], strides = [1, 1]} : vector<32x128xbf16> to vector<32x32xbf16>
    %32 = tpu.concatenate %28, %29, %30, %31 in 0 : vector<32x32xbf16>, vector<32x32xbf16>, vector<32x32xbf16>, vector<32x32xbf16> -> vector<128x32xbf16>
    %c0_18 = arith.constant 0 : index
    %c0_19 = arith.constant 0 : index
    %33 = vector.load %arg4[%c0_18, %c0_19] : memref<512x128xbf16, #tpu.memory_space<vmem>>, vector<512x128xbf16>
    %cst_20 = arith.constant dense<0.000000e+00> : vector<512x32xf32>
    %34 = tpu.matmul %33, %32, %cst_20 {dimension_numbers = #tpu.dot_dimension_numbers<[1], [0], [0], [1], [0, 0, 1, 1], [], []>} : vector<512x128xbf16>, vector<128x32xbf16>, vector<512x32xf32> -> vector<512x32xf32>
    %35 = arith.truncf %34 : vector<512x32xf32> to vector<512x32xbf16>
    %36 = vector.extract_strided_slice %35 {offsets = [0, 0], sizes = [128, 32], strides = [1, 1]} : vector<512x32xbf16> to vector<128x32xbf16>
    %c0_21 = arith.constant 0 : index
    %c0_22 = arith.constant 0 : index
    %c0_23 = arith.constant 0 : index
    %37 = vector.load %arg5[%c0_21, %c0_22, %c0_23] : memref<4x32x128xbf16, #tpu.memory_space<vmem>>, vector<1x32x128xbf16>
    %38 = vector.shape_cast %37 : vector<1x32x128xbf16> to vector<32x128xbf16>
    %cst_24 = arith.constant dense<0.000000e+00> : vector<128x128xf32>
    %39 = tpu.matmul %36, %38, %cst_24 {dimension_numbers = #tpu.dot_dimension_numbers<[1], [0], [0], [1], [0, 0, 1, 1], [], []>} : vector<128x32xbf16>, vector<32x128xbf16>, vector<128x128xf32> -> vector<128x128xf32>
    %40 = vector.extract_strided_slice %35 {offsets = [128, 0], sizes = [128, 32], strides = [1, 1]} : vector<512x32xbf16> to vector<128x32xbf16>
    %c1_25 = arith.constant 1 : index
    %c0_26 = arith.constant 0 : index
    %c0_27 = arith.constant 0 : index
    %41 = vector.load %arg5[%c1_25, %c0_26, %c0_27] : memref<4x32x128xbf16, #tpu.memory_space<vmem>>, vector<1x32x128xbf16>
    %42 = vector.shape_cast %41 : vector<1x32x128xbf16> to vector<32x128xbf16>
    %cst_28 = arith.constant dense<0.000000e+00> : vector<128x128xf32>
    %43 = tpu.matmul %40, %42, %cst_28 {dimension_numbers = #tpu.dot_dimension_numbers<[1], [0], [0], [1], [0, 0, 1, 1], [], []>} : vector<128x32xbf16>, vector<32x128xbf16>, vector<128x128xf32> -> vector<128x128xf32>
    %44 = arith.addf %39, %43 : vector<128x128xf32>
    %45 = vector.extract_strided_slice %35 {offsets = [256, 0], sizes = [128, 32], strides = [1, 1]} : vector<512x32xbf16> to vector<128x32xbf16>
    %c2_29 = arith.constant 2 : index
    %c0_30 = arith.constant 0 : index
    %c0_31 = arith.constant 0 : index
    %46 = vector.load %arg5[%c2_29, %c0_30, %c0_31] : memref<4x32x128xbf16, #tpu.memory_space<vmem>>, vector<1x32x128xbf16>
    %47 = vector.shape_cast %46 : vector<1x32x128xbf16> to vector<32x128xbf16>
    %cst_32 = arith.constant dense<0.000000e+00> : vector<128x128xf32>
    %48 = tpu.matmul %45, %47, %cst_32 {dimension_numbers = #tpu.dot_dimension_numbers<[1], [0], [0], [1], [0, 0, 1, 1], [], []>} : vector<128x32xbf16>, vector<32x128xbf16>, vector<128x128xf32> -> vector<128x128xf32>
    %49 = arith.addf %44, %48 : vector<128x128xf32>
    %50 = vector.extract_strided_slice %35 {offsets = [384, 0], sizes = [128, 32], strides = [1, 1]} : vector<512x32xbf16> to vector<128x32xbf16>
    %c3_33 = arith.constant 3 : index
    %c0_34 = arith.constant 0 : index
    %c0_35 = arith.constant 0 : index
    %51 = vector.load %arg5[%c3_33, %c0_34, %c0_35] : memref<4x32x128xbf16, #tpu.memory_space<vmem>>, vector<1x32x128xbf16>
    %52 = vector.shape_cast %51 : vector<1x32x128xbf16> to vector<32x128xbf16>
    %cst_36 = arith.constant dense<0.000000e+00> : vector<128x128xf32>
    %53 = tpu.matmul %50, %52, %cst_36 {dimension_numbers = #tpu.dot_dimension_numbers<[1], [0], [0], [1], [0, 0, 1, 1], [], []>} : vector<128x32xbf16>, vector<32x128xbf16>, vector<128x128xf32> -> vector<128x128xf32>
    %54 = arith.addf %49, %53 : vector<128x128xf32>
    %cst_37 = arith.constant 0.000000e+00 : f32
    %55 = vector.broadcast %cst_37 : f32 to vector<128x128xf32>
    %56 = arith.maximumf %54, %55 : vector<128x128xf32>
    %57 = arith.truncf %56 : vector<128x128xf32> to vector<128x128xbf16>
    %c0_38 = arith.constant 0 : index
    %c0_39 = arith.constant 0 : index
    %58 = vector.load %arg6[%c0_38, %c0_39] : memref<128x128xbf16, #tpu.memory_space<vmem>>, vector<128x128xbf16>
    %cst_40 = arith.constant dense<0.000000e+00> : vector<128x128xf32>
    %59 = tpu.matmul %57, %58, %cst_40 {dimension_numbers = #tpu.dot_dimension_numbers<[1], [0], [0], [1], [0, 0, 1, 1], [], []>} : vector<128x128xbf16>, vector<128x128xbf16>, vector<128x128xf32> -> vector<128x128xf32>
    %60 = math.tanh %59 : vector<128x128xf32>
    %c0_41 = arith.constant 0 : index
    %c0_42 = arith.constant 0 : index
    %61 = vector.load %arg7[%c0_41, %c0_42] : memref<128x128xf32, #tpu.memory_space<vmem>>, vector<128x128xf32>
    tpu.vector_store %arg7[%c0_41, %c0_42], %60 {strides = array<i32>} : memref<128x128xf32, #tpu.memory_space<vmem>>, vector<128x128xf32>,
    return
  }
  func.func @transform_0(%arg0: i32) -> (i32, i32) {
    %c0_i32 = arith.constant 0 : i32
    %c0_i32_0 = arith.constant 0 : i32
    %c0_i32_1 = arith.constant 0 : i32
    return %c0_i32, %c0_i32_0 : i32, i32
  }
  func.func @transform_1(%arg0: i32) -> (i32, i32) {
    %c0_i32 = arith.constant 0 : i32
    %c0_i32_0 = arith.constant 0 : i32
    %c0_i32_1 = arith.constant 0 : i32
    return %c0_i32, %c0_i32_0 : i32, i32
  }
  func.func @transform_2(%arg0: i32) -> (i32, i32, i32) {
    %c0_i32 = arith.constant 0 : i32
    %c0_i32_0 = arith.constant 0 : i32
    %c0_i32_1 = arith.constant 0 : i32
    %c0_i32_2 = arith.constant 0 : i32
    return %c0_i32, %c0_i32_0, %c0_i32_1 : i32, i32, i32
  }
  func.func @transform_3(%arg0: i32) -> (i32, i32) {
    %c0_i32 = arith.constant 0 : i32
    %c0_i32_0 = arith.constant 0 : i32
    %c0_i32_1 = arith.constant 0 : i32
    return %c0_i32, %c0_i32_0 : i32, i32
  }
  func.func @transform_4(%arg0: i32) -> (i32, i32, i32) {
    %c0_i32 = arith.constant 0 : i32
    %c0_i32_0 = arith.constant 0 : i32
    %c0_i32_1 = arith.constant 0 : i32
    %c0_i32_2 = arith.constant 0 : i32
    return %c0_i32, %c0_i32_0, %c0_i32_1 : i32, i32, i32
  }
  func.func @transform_5(%arg0: i32) -> (i32, i32) {
    %c0_i32 = arith.constant 0 : i32
    %c0_i32_0 = arith.constant 0 : i32
    %c0_i32_1 = arith.constant 0 : i32
    return %c0_i32, %c0_i32_0 : i32, i32
  }
  func.func @transform_6(%arg0: i32) -> (i32, i32) {
    %c0_i32 = arith.constant 0 : i32
    %c0_i32_0 = arith.constant 0 : i32
    %c0_i32_1 = arith.constant 0 : i32
    return %c0_i32, %c0_i32_0 : i32, i32
  }
}

</mosaic_0001>

<llo_original>
// kernel: generator_forward.1
$region0: #{generator_forward.1}
  #allocation0 [shape = 'u32[]', space=smem, size = 0x4, offset = 0x4, fixed_abs, tag = 'smem constant byte address 0x4 - core index']
  #allocation1 [shape = 'u32[144,128]{1,0:T(1,128)}', space=vmem, size = 0x12000, scoped, tag = 'internal scratch']
  %s0 = inlined_call_operand.vmem [shape: bf16[128,384], index: 0, kind: input, shape index: {}]
  %s1 = inlined_call_operand.vmem [shape: bf16[384,32], index: 1, kind: input, shape index: {}]
  %s2 = inlined_call_operand.vmem [shape: bf16[4,32,128], index: 2, kind: input, shape index: {}]
  %s3 = inlined_call_operand.vmem [shape: bf16[512,128], index: 3, kind: input, shape index: {}]
  %s4 = inlined_call_operand.vmem [shape: bf16[4,32,128], index: 4, kind: input, shape index: {}]
  %s5 = inlined_call_operand.vmem [shape: bf16[128,128], index: 5, kind: input, shape index: {}]
  %s6 = inlined_call_operand.vmem [shape: f32[128,128], index: 6, kind: output, shape index: {}]
  %s7 = sld [smem:[#allocation0]]
  $region34: #{generator_forward.1} parent=0
    _
  %s9 = ssub.s32 1, %s7
  %s10 = scalar_select 0, %s9, %s7
  // Predicated region
  $region2: #{generator_forward.1} parent=0 // pred_check
    _
  $region3: #{generator_forward.1} parent=0 // pred_check_branch
    %12 = sbr.rel (0) target = $region5
  $region4: #{generator_forward.1} parent=0 // pred_region
    _
  $region5: #{generator_forward.1} parent=0 // pred_fallthru
    _
  // Predicated region
  $region6: #{generator_forward.1} parent=0 // pred_check
    _
  $region7: #{generator_forward.1} parent=0 // pred_check_branch
    %14 = sbr.rel (0) target = $region9
  $region8: #{generator_forward.1} parent=0 // pred_region
    _
  $region9: #{generator_forward.1} parent=0 // pred_fallthru
    _
  // Predicated region
  $region10: #{generator_forward.1} parent=0 // pred_check
    _
  $region11: #{generator_forward.1} parent=0 // pred_check_branch
    %16 = sbr.rel (0) target = $region13
  $region12: #{generator_forward.1} parent=0 // pred_region
    _
  $region13: #{generator_forward.1} parent=0 // pred_fallthru
    _
  // Predicated region
  $region14: #{generator_forward.1} parent=0 // pred_check
    _
  $region15: #{generator_forward.1} parent=0 // pred_check_branch
    %18 = sbr.rel (0) target = $region17
  $region16: #{generator_forward.1} parent=0 // pred_region
    _
  $region17: #{generator_forward.1} parent=0 // pred_fallthru
    _
  // Predicated region
  $region18: #{generator_forward.1} parent=0 // pred_check
    _
  $region19: #{generator_forward.1} parent=0 // pred_check_branch
    %20 = sbr.rel (0) target = $region21
  $region20: #{generator_forward.1} parent=0 // pred_region
    _
  $region21: #{generator_forward.1} parent=0 // pred_fallthru
    _
  // Predicated region
  $region22: #{generator_forward.1} parent=0 // pred_check
    _
  $region23: #{generator_forward.1} parent=0 // pred_check_branch
    %22 = sbr.rel (0) target = $region25
  $region24: #{generator_forward.1} parent=0 // pred_region
    _
  $region25: #{generator_forward.1} parent=0 // pred_fallthru
    _
  %v24 = vld [vmem:[%s0] sm:$0xff]
  %v25 = vld [vmem:[%s0 + $0x8] sm:$0xf]
  %v26 = vld [vmem:[%s0 + $0xc] sm:$0xff]
  %v27 = vld [vmem:[%s0 + $0x14] sm:$0xf]
  %v28 = vld [vmem:[%s0 + $0x18] sm:$0xff]
  %v29 = vld [vmem:[%s0 + $0x20] sm:$0xf]
  %v30 = vld [vmem:[%s0 + $0x24] sm:$0xff]
  %v31 = vld [vmem:[%s0 + $0x2c] sm:$0xf]
  %v32 = vld [vmem:[%s0 + $0x30] sm:$0xff]
  %v33 = vld [vmem:[%s0 + $0x38] sm:$0xf]
  %v34 = vld [vmem:[%s0 + $0x3c] sm:$0xff]
  %v35 = vld [vmem:[%s0 + $0x44] sm:$0xf]
  %v36 = vld [vmem:[%s0 + $0x48] sm:$0xff]
  %v37 = vld [vmem:[%s0 + $0x50] sm:$0xf]
  %v38 = vld [vmem:[%s0 + $0x54] sm:$0xff]
  %v39 = vld [vmem:[%s0 + $0x5c] sm:$0xf]
  %v40 = vld [vmem:[%s0 + $0x60] sm:$0xff]
  %v41 = vld [vmem:[%s0 + $0x68] sm:$0xf]
  %v42 = vld [vmem:[%s0 + $0x6c] sm:$0xff]
  %v43 = vld [vmem:[%s0 + $0x74] sm:$0xf]
  %v44 = vld [vmem:[%s0 + $0x78] sm:$0xff]
  %v45 = vld [vmem:[%s0 + $0x80] sm:$0xf]
  %v46 = vld [vmem:[%s0 + $0x84] sm:$0xff]
  %v47 = vld [vmem:[%s0 + $0x8c] sm:$0xf]
  %v48 = vld [vmem:[%s0 + $0x90] sm:$0xff]
  %v49 = vld [vmem:[%s0 + $0x98] sm:$0xf]
  %v50 = vld [vmem:[%s0 + $0x9c] sm:$0xff]
  %v51 = vld [vmem:[%s0 + $0xa4] sm:$0xf]
  %v52 = vld [vmem:[%s0 + $0xa8] sm:$0xff]
  %v53 = vld [vmem:[%s0 + $0xb0] sm:$0xf]
  %v54 = vld [vmem:[%s0 + $0xb4] sm:$0xff]
  %v55 = vld [vmem:[%s0 + $0xbc] sm:$0xf]
  %v56 = vld [vmem:[%s1] sm:$0xf]
  %v57 = vld [vmem:[%s1 + $0x4] sm:$0xf]
  %v58 = vld [vmem:[%s1 + $0x8] sm:$0xf]
  %v59 = vld [vmem:[%s1 + $0xc] sm:$0xf]
  %v60 = vld [vmem:[%s1 + $0x10] sm:$0xf]
  %v61 = vld [vmem:[%s1 + $0x14] sm:$0xf]
  %v62 = vld [vmem:[%s1 + $0x18] sm:$0xf]
  %v63 = vld [vmem:[%s1 + $0x1c] sm:$0xf]
  %v64 = vld [vmem:[%s1 + $0x20] sm:$0xf]
  %v65 = vld [vmem:[%s1 + $0x24] sm:$0xf]
  %v66 = vld [vmem:[%s1 + $0x28] sm:$0xf]
  %v67 = vld [vmem:[%s1 + $0x2c] sm:$0xf]
  %v68 = vld [vmem:[%s1 + $0x30] sm:$0xf]
  %v69 = vld [vmem:[%s1 + $0x34] sm:$0xf]
  %v70 = vld [vmem:[%s1 + $0x38] sm:$0xf]
  %v71 = vld [vmem:[%s1 + $0x3c] sm:$0xf]
  %v72 = vld [vmem:[%s1 + $0x40] sm:$0xf]
  %v73 = vld [vmem:[%s1 + $0x44] sm:$0xf]
  %v74 = vld [vmem:[%s1 + $0x48] sm:$0xf]
  %v75 = vld [vmem:[%s1 + $0x4c] sm:$0xf]
  %v76 = vld [vmem:[%s1 + $0x50] sm:$0xf]
  %v77 = vld [vmem:[%s1 + $0x54] sm:$0xf]
  %v78 = vld [vmem:[%s1 + $0x58] sm:$0xf]
  %v79 = vld [vmem:[%s1 + $0x5c] sm:$0xf]
  %v80 = vld [vmem:[%s1 + $0x60] sm:$0xf]
  %v81 = vld [vmem:[%s1 + $0x64] sm:$0xf]
  %v82 = vld [vmem:[%s1 + $0x68] sm:$0xf]
  %v83 = vld [vmem:[%s1 + $0x6c] sm:$0xf]
  %v84 = vld [vmem:[%s1 + $0x70] sm:$0xf]
  %v85 = vld [vmem:[%s1 + $0x74] sm:$0xf]
  %v86 = vld [vmem:[%s1 + $0x78] sm:$0xf]
  %v87 = vld [vmem:[%s1 + $0x7c] sm:$0xf]
  %v88 = vld [vmem:[%s1 + $0x80] sm:$0xf]
  %v89 = vld [vmem:[%s1 + $0x84] sm:$0xf]
  %v90 = vld [vmem:[%s1 + $0x88] sm:$0xf]
  %v91 = vld [vmem:[%s1 + $0x8c] sm:$0xf]
  %v92 = vld [vmem:[%s1 + $0x90] sm:$0xf]
  %v93 = vld [vmem:[%s1 + $0x94] sm:$0xf]
  %v94 = vld [vmem:[%s1 + $0x98] sm:$0xf]
  %v95 = vld [vmem:[%s1 + $0x9c] sm:$0xf]
  %v96 = vld [vmem:[%s1 + $0xa0] sm:$0xf]
  %v97 = vld [vmem:[%s1 + $0xa4] sm:$0xf]
  %v98 = vld [vmem:[%s1 + $0xa8] sm:$0xf]
  %v99 = vld [vmem:[%s1 + $0xac] sm:$0xf]
  %v100 = vld [vmem:[%s1 + $0xb0] sm:$0xf]
  %v101 = vld [vmem:[%s1 + $0xb4] sm:$0xf]
  %v102 = vld [vmem:[%s1 + $0xb8] sm:$0xf]
  %v103 = vld [vmem:[%s1 + $0xbc] sm:$0xf]
  %v136 = vunpack.c.l.b16 %v24
  %v137 = vunpack.c.h.b16 %v24
  %v138 = vunpack.c.l.b16 %v25
  %v139 = vunpack.c.l.b16 %v26
  %v140 = vunpack.c.h.b16 %v26
  %v141 = vunpack.c.l.b16 %v27
  %v142 = vunpack.c.l.b16 %v28
  %v143 = vunpack.c.h.b16 %v28
  %v144 = vunpack.c.l.b16 %v29
  %v145 = vunpack.c.l.b16 %v30
  %v146 = vunpack.c.h.b16 %v30
  %v147 = vunpack.c.l.b16 %v31
  %v148 = vunpack.c.l.b16 %v32
  %v149 = vunpack.c.h.b16 %v32
  %v150 = vunpack.c.l.b16 %v33
  %v151 = vunpack.c.l.b16 %v34
  %v152 = vunpack.c.h.b16 %v34
  %v153 = vunpack.c.l.b16 %v35
  %v154 = vunpack.c.l.b16 %v36
  %v155 = vunpack.c.h.b16 %v36
  %v156 = vunpack.c.l.b16 %v37
  %v157 = vunpack.c.l.b16 %v38
  %v158 = vunpack.c.h.b16 %v38
  %v159 = vunpack.c.l.b16 %v39
  %v160 = vunpack.c.l.b16 %v40
  %v161 = vunpack.c.h.b16 %v40
  %v162 = vunpack.c.l.b16 %v41
  %v163 = vunpack.c.l.b16 %v42
  %v164 = vunpack.c.h.b16 %v42
  %v165 = vunpack.c.l.b16 %v43
  %v166 = vunpack.c.l.b16 %v44
  %v167 = vunpack.c.h.b16 %v44
  %v168 = vunpack.c.l.b16 %v45
  %v169 = vunpack.c.l.b16 %v46
  %v170 = vunpack.c.h.b16 %v46
  %v171 = vunpack.c.l.b16 %v47
  %v172 = vunpack.c.l.b16 %v48
  %v173 = vunpack.c.h.b16 %v48
  %v174 = vunpack.c.l.b16 %v49
  %v175 = vunpack.c.l.b16 %v50
  %v176 = vunpack.c.h.b16 %v50
  %v177 = vunpack.c.l.b16 %v51
  %v178 = vunpack.c.l.b16 %v52
  %v179 = vunpack.c.h.b16 %v52
  %v180 = vunpack.c.l.b16 %v53
  %v181 = vunpack.c.l.b16 %v54
  %v182 = vunpack.c.h.b16 %v54
  %v183 = vunpack.c.l.b16 %v55
  %v184 = vpack.c.b16 %v139, %v136
  %v185 = vpack.c.b16 %v140, %v137
  %v186 = vpack.c.b16 %v141, %v138
  %v187 = vpack.c.b16 %v145, %v142
  %v188 = vpack.c.b16 %v146, %v143
  %v189 = vpack.c.b16 %v147, %v144
  %v190 = vpack.c.b16 %v151, %v148
  %v191 = vpack.c.b16 %v152, %v149
  %v192 = vpack.c.b16 %v153, %v150
  %v193 = vpack.c.b16 %v157, %v154
  %v194 = vpack.c.b16 %v158, %v155
  %v195 = vpack.c.b16 %v159, %v156
  %v196 = vpack.c.b16 %v163, %v160
  %v197 = vpack.c.b16 %v164, %v161
  %v198 = vpack.c.b16 %v165, %v162
  %v199 = vpack.c.b16 %v169, %v166
  %v200 = vpack.c.b16 %v170, %v167
  %v201 = vpack.c.b16 %v171, %v168
  %v202 = vpack.c.b16 %v175, %v172
  %v203 = vpack.c.b16 %v176, %v173
  %v204 = vpack.c.b16 %v177, %v174
  %v205 = vpack.c.b16 %v181, %v178
  %v206 = vpack.c.b16 %v182, %v179
  %v207 = vpack.c.b16 %v183, %v180
  %v280 = vunpack.c.l.b16 %v56
  %v281 = vunpack.c.l.b16 %v57
  %v282 = vunpack.c.l.b16 %v58
  %v283 = vunpack.c.l.b16 %v59
  %v284 = vunpack.c.l.b16 %v60
  %v285 = vunpack.c.l.b16 %v61
  %v286 = vunpack.c.l.b16 %v62
  %v287 = vunpack.c.l.b16 %v63
  %v288 = vunpack.c.l.b16 %v64
  %v289 = vunpack.c.l.b16 %v65
  %v290 = vunpack.c.l.b16 %v66
  %v291 = vunpack.c.l.b16 %v67
  %v292 = vunpack.c.l.b16 %v68
  %v293 = vunpack.c.l.b16 %v69
  %v294 = vunpack.c.l.b16 %v70
  %v295 = vunpack.c.l.b16 %v71
  %v296 = vunpack.c.l.b16 %v72
  %v297 = vunpack.c.l.b16 %v73
  %v298 = vunpack.c.l.b16 %v74
  %v299 = vunpack.c.l.b16 %v75
  %v300 = vunpack.c.l.b16 %v76
  %v301 = vunpack.c.l.b16 %v77
  %v302 = vunpack.c.l.b16 %v78
  %v303 = vunpack.c.l.b16 %v79
  %v304 = vunpack.c.l.b16 %v80
  %v305 = vunpack.c.l.b16 %v81
  %v306 = vunpack.c.l.b16 %v82
  %v307 = vunpack.c.l.b16 %v83
  %v308 = vunpack.c.l.b16 %v84
  %v309 = vunpack.c.l.b16 %v85
  %v310 = vunpack.c.l.b16 %v86
  %v311 = vunpack.c.l.b16 %v87
  %v312 = vunpack.c.l.b16 %v88
  %v313 = vunpack.c.l.b16 %v89
  %v314 = vunpack.c.l.b16 %v90
  %v315 = vunpack.c.l.b16 %v91
  %v316 = vunpack.c.l.b16 %v92
  %v317 = vunpack.c.l.b16 %v93
  %v318 = vunpack.c.l.b16 %v94
  %v319 = vunpack.c.l.b16 %v95
  %v320 = vunpack.c.l.b16 %v96
  %v321 = vunpack.c.l.b16 %v97
  %v322 = vunpack.c.l.b16 %v98
  %v323 = vunpack.c.l.b16 %v99
  %v324 = vunpack.c.l.b16 %v100
  %v325 = vunpack.c.l.b16 %v101
  %v326 = vunpack.c.l.b16 %v102
  %v327 = vunpack.c.l.b16 %v103
  %v328 = vpack.c.b16 %v281, %v280
  %v329 = vpack.c.b16 %v283, %v282
  %v330 = vpack.c.b16 %v285, %v284
  %v331 = vpack.c.b16 %v287, %v286
  %v332 = vpack.c.b16 %v289, %v288
  %v333 = vpack.c.b16 %v291, %v290
  %v334 = vpack.c.b16 %v293, %v292
  %v335 = vpack.c.b16 %v295, %v294
  %v336 = vpack.c.b16 %v297, %v296
  %v337 = vpack.c.b16 %v299, %v298
  %v338 = vpack.c.b16 %v301, %v300
  %v339 = vpack.c.b16 %v303, %v302
  %v340 = vpack.c.b16 %v305, %v304
  %v341 = vpack.c.b16 %v307, %v306
  %v342 = vpack.c.b16 %v309, %v308
  %v343 = vpack.c.b16 %v311, %v310
  %v344 = vpack.c.b16 %v313, %v312
  %v345 = vpack.c.b16 %v315, %v314
  %v346 = vpack.c.b16 %v317, %v316
  %v347 = vpack.c.b16 %v319, %v318
  %v348 = vpack.c.b16 %v321, %v320
  %v349 = vpack.c.b16 %v323, %v322
  %v350 = vpack.c.b16 %v325, %v324
  %v351 = vpack.c.b16 %v327, %v326
  %376 = vmatprep.subr.bf16.mxu0 0
  %377 = vmatpush1.bf16.msra.mxu0 %v328
  %378 = vmatprep.subr.bf16.mxu0 0
  %379 = vmatpush1.bf16.msra.mxu0 %v329
  %380 = vmatprep.subr.bf16.mxu0 0
  %381 = vmatpush1.bf16.msra.mxu0 %v330
  %382 = vmatprep.subr.bf16.mxu0 0
  %383 = vmatpush1.bf16.msra.mxu0 %v331
  %384 = vmatprep.subr.bf16.mxu0 0
  %385 = vmatpush1.bf16.msra.mxu0 %v332
  %386 = vmatprep.subr.bf16.mxu0 0
  %387 = vmatpush1.bf16.msra.mxu0 %v333
  %388 = vmatprep.subr.bf16.mxu0 0
  %389 = vmatpush1.bf16.msra.mxu0 %v334
  %390 = vmatprep.subr.bf16.mxu0 0
  %391 = vmatpush1.bf16.msra.mxu0 %v335
  %392 = vmatprep.subr.bf16.mxu0 0
  %393 = vmatpush1.bf16.msra.mxu0 %v336
  %394 = vmatprep.subr.bf16.mxu0 0
  %395 = vmatpush1.bf16.msra.mxu0 %v337
  %396 = vmatprep.subr.bf16.mxu0 0
  %397 = vmatpush1.bf16.msra.mxu0 %v338
  %398 = vmatprep.subr.bf16.mxu0 0
  %399 = vmatpush1.bf16.msra.mxu0 %v339
  %400 = vmatprep.subr.bf16.mxu0 0
  %401 = vmatpush1.bf16.msra.mxu0 %v340
  %402 = vmatprep.subr.bf16.mxu0 0
  %403 = vmatpush1.bf16.msra.mxu0 %v341
  %404 = vmatprep.subr.bf16.mxu0 0
  %405 = vmatpush1.bf16.msra.mxu0 %v342
  %406 = vmatprep.subr.bf16.mxu0 0
  %407 = vmatpush1.bf16.msra.mxu0 %v343
  %408 = vmatprep.mubr.bf16.mxu0 %v185
  %409 = vmatmul.mubr.bf16.gmra.mrb[0].mxu0 %v184
  %v410 = vpop.f32.mrb[0].mxu0
  %v411 = vadd.f32 0.0, %v410
  %v412 = vpop.f32.mrb[0].mxu0
  %v413 = vpop.f32.mrb[0].mxu0
  %v414 = vadd.f32 0.0, %v413
  %v415 = vpop.f32.mrb[0].mxu0
  %416 = vmatprep.mubr.bf16.mxu0 %v188
  %417 = vmatmul.mubr.bf16.gmra.mrb[0].mxu0 %v187
  %v418 = vpop.f32.mrb[0].mxu0
  %v419 = vadd.f32 0.0, %v418
  %v420 = vpop.f32.mrb[0].mxu0
  %v421 = vpop.f32.mrb[0].mxu0
  %v422 = vadd.f32 0.0, %v421
  %v423 = vpop.f32.mrb[0].mxu0
  %424 = vmatprep.mubr.bf16.mxu0 %v191
  %425 = vmatmul.mubr.bf16.gmra.mrb[0].mxu0 %v190
  %v426 = vpop.f32.mrb[0].mxu0
  %v427 = vadd.f32 0.0, %v426
  %v428 = vpop.f32.mrb[0].mxu0
  %v429 = vpop.f32.mrb[0].mxu0
  %v430 = vadd.f32 0.0, %v429
  %v431 = vpop.f32.mrb[0].mxu0
  %432 = vmatprep.mubr.bf16.mxu0 %v194
  %433 = vmatmul.mubr.bf16.gmra.mrb[0].mxu0 %v193
  %v434 = vpop.f32.mrb[0].mxu0
  %v435 = vadd.f32 0.0, %v434
  %v436 = vpop.f32.mrb[0].mxu0
  %v437 = vpop.f32.mrb[0].mxu0
  %v438 = vadd.f32 0.0, %v437
  %v439 = vpop.f32.mrb[0].mxu0
  %440 = vmatprep.mubr.bf16.mxu0 %v197
  %441 = vmatmul.mubr.bf16.gmra.mrb[0].mxu0 %v196
  %v442 = vpop.f32.mrb[0].mxu0
  %v443 = vadd.f32 0.0, %v442
  %v444 = vpop.f32.mrb[0].mxu0
  %v445 = vpop.f32.mrb[0].mxu0
  %v446 = vadd.f32 0.0, %v445
  %v447 = vpop.f32.mrb[0].mxu0
  %448 = vmatprep.mubr.bf16.mxu0 %v200
  %449 = vmatmul.mubr.bf16.gmra.mrb[0].mxu0 %v199
  %v450 = vpop.f32.mrb[0].mxu0
  %v451 = vadd.f32 0.0, %v450
  %v452 = vpop.f32.mrb[0].mxu0
  %v453 = vpop.f32.mrb[0].mxu0
  %v454 = vadd.f32 0.0, %v453
  %v455 = vpop.f32.mrb[0].mxu0
  %456 = vmatprep.mubr.bf16.mxu0 %v203
  %457 = vmatmul.mubr.bf16.gmra.mrb[0].mxu0 %v202
  %v458 = vpop.f32.mrb[0].mxu0
  %v459 = vadd.f32 0.0, %v458
  %v460 = vpop.f32.mrb[0].mxu0
  %v461 = vpop.f32.mrb[0].mxu0
  %v462 = vadd.f32 0.0, %v461
  %v463 = vpop.f32.mrb[0].mxu0
  %464 = vmatprep.mubr.bf16.mxu0 %v206
  %465 = vmatmul.mubr.bf16.gmra.mrb[0].mxu0 %v205
  %v466 = vpop.f32.mrb[0].mxu0
  %v467 = vadd.f32 0.0, %v466
  %v468 = vpop.f32.mrb[0].mxu0
  %v469 = vpop.f32.mrb[0].mxu0
  %v470 = vadd.f32 0.0, %v469
  %v471 = vpop.f32.mrb[0].mxu0
  %472 = vdwg.mxu0
  %473 = vmatprep.subr.bf16.mxu0 0
  %474 = vmatpush1.bf16.msra.mxu0 %v344
  %475 = vmatprep.subr.bf16.mxu0 0
  %476 = vmatpush1.bf16.msra.mxu0 %v345
  %477 = vmatprep.subr.bf16.mxu0 0
  %478 = vmatpush1.bf16.msra.mxu0 %v346
  %479 = vmatprep.subr.bf16.mxu0 0
  %480 = vmatpush1.bf16.msra.mxu0 %v347
  %481 = vmatprep.subr.bf16.mxu0 0
  %482 = vmatpush1.bf16.msra.mxu0 %v348
  %483 = vmatprep.subr.bf16.mxu0 0
  %484 = vmatpush1.bf16.msra.mxu0 %v349
  %485 = vmatprep.subr.bf16.mxu0 0
  %486 = vmatpush1.bf16.msra.mxu0 %v350
  %487 = vmatprep.subr.bf16.mxu0 0
  %488 = vmatpush1.bf16.msra.mxu0 %v351
  %489 = vmatprep.subr.bf16.mxu0 0
  %490 = vmatpush1.bf16.msra.mxu0 0
  %491 = vmatprep.subr.bf16.mxu0 0
  %492 = vmatpush1.bf16.msra.mxu0 0
  %493 = vmatprep.subr.bf16.mxu0 0
  %494 = vmatpush1.bf16.msra.mxu0 0
  %495 = vmatprep.subr.bf16.mxu0 0
  %496 = vmatpush1.bf16.msra.mxu0 0
  %497 = vmatprep.subr.bf16.mxu0 0
  %498 = vmatpush1.bf16.msra.mxu0 0
  %499 = vmatprep.subr.bf16.mxu0 0
  %500 = vmatpush1.bf16.msra.mxu0 0
  %501 = vmatprep.subr.bf16.mxu0 0
  %502 = vmatpush1.bf16.msra.mxu0 0
  %503 = vmatprep.subr.bf16.mxu0 0
  %504 = vmatpush1.bf16.msra.mxu0 0
  %505 = vmatprep.mubr.bf16.mxu0 0
  %506 = vmatmul.mubr.bf16.gmra.mrb[0].mxu0 %v186
  %v507 = vpop.f32.mrb[0].mxu0
  %v508 = vadd.f32 %v411, %v507
  %v509 = vpop.f32.mrb[0].mxu0
  %v510 = vpop.f32.mrb[0].mxu0
  %v511 = vadd.f32 %v414, %v510
  %v512 = vpop.f32.mrb[0].mxu0
  %513 = vmatprep.mubr.bf16.mxu0 0
  %514 = vmatmul.mubr.bf16.gmra.mrb[0].mxu0 %v189
  %v515 = vpop.f32.mrb[0].mxu0
  %v516 = vadd.f32 %v419, %v515
  %v517 = vpop.f32.mrb[0].mxu0
  %v518 = vpop.f32.mrb[0].mxu0
  %v519 = vadd.f32 %v422, %v518
  %v520 = vpop.f32.mrb[0].mxu0
  %521 = vmatprep.mubr.bf16.mxu0 0
  %522 = vmatmul.mubr.bf16.gmra.mrb[0].mxu0 %v192
  %v523 = vpop.f32.mrb[0].mxu0
  %v524 = vadd.f32 %v427, %v523
  %v525 = vpop.f32.mrb[0].mxu0
  %v526 = vpop.f32.mrb[0].mxu0
  %v527 = vadd.f32 %v430, %v526
  %v528 = vpop.f32.mrb[0].mxu0
  %529 = vmatprep.mubr.bf16.mxu0 0
  %530 = vmatmul.mubr.bf16.gmra.mrb[0].mxu0 %v195
  %v531 = vpop.f32.mrb[0].mxu0
  %v532 = vadd.f32 %v435, %v531
  %v533 = vpop.f32.mrb[0].mxu0
  %v534 = vpop.f32.mrb[0].mxu0
  %v535 = vadd.f32 %v438, %v534
  %v536 = vpop.f32.mrb[0].mxu0
  %537 = vmatprep.mubr.bf16.mxu0 0
  %538 = vmatmul.mubr.bf16.gmra.mrb[0].mxu0 %v198
  %v539 = vpop.f32.mrb[0].mxu0
  %v540 = vadd.f32 %v443, %v539
  %v541 = vpop.f32.mrb[0].mxu0
  %v542 = vpop.f32.mrb[0].mxu0
  %v543 = vadd.f32 %v446, %v542
  %v544 = vpop.f32.mrb[0].mxu0
  %545 = vmatprep.mubr.bf16.mxu0 0
  %546 = vmatmul.mubr.bf16.gmra.mrb[0].mxu0 %v201
  %v547 = vpop.f32.mrb[0].mxu0
  %v548 = vadd.f32 %v451, %v547
  %v549 = vpop.f32.mrb[0].mxu0
  %v550 = vpop.f32.mrb[0].mxu0
  %v551 = vadd.f32 %v454, %v550
  %v552 = vpop.f32.mrb[0].mxu0
  %553 = vmatprep.mubr.bf16.mxu0 0
  %554 = vmatmul.mubr.bf16.gmra.mrb[0].mxu0 %v204
  %v555 = vpop.f32.mrb[0].mxu0
  %v556 = vadd.f32 %v459, %v555
  %v557 = vpop.f32.mrb[0].mxu0
  %v558 = vpop.f32.mrb[0].mxu0
  %v559 = vadd.f32 %v462, %v558
  %v560 = vpop.f32.mrb[0].mxu0
  %561 = vmatprep.mubr.bf16.mxu0 0
  %562 = vmatmul.mubr.bf16.gmra.mrb[0].mxu0 %v207
  %v563 = vpop.f32.mrb[0].mxu0
  %v564 = vadd.f32 %v467, %v563
  %v565 = vpop.f32.mrb[0].mxu0
  %v566 = vpop.f32.mrb[0].mxu0
  %v567 = vadd.f32 %v470, %v566
  %v568 = vpop.f32.mrb[0].mxu0
  %569 = vdwg.mxu0
  %v570 = vmax.f32 %v508, 0.0
  %v571 = vmax.f32 %v511, 0.0
  %v572 = vmax.f32 %v516, 0.0
  %v573 = vmax.f32 %v519, 0.0
  %v574 = vmax.f32 %v524, 0.0
  %v575 = vmax.f32 %v527, 0.0
  %v576 = vmax.f32 %v532, 0.0
  %v577 = vmax.f32 %v535, 0.0
  %v578 = vmax.f32 %v540, 0.0
  %v579 = vmax.f32 %v543, 0.0
  %v580 = vmax.f32 %v548, 0.0
  %v581 = vmax.f32 %v551, 0.0
  %v582 = vmax.f32 %v556, 0.0
  %v583 = vmax.f32 %v559, 0.0
  %v584 = vmax.f32 %v564, 0.0
  %v585 = vmax.f32 %v567, 0.0
  %v586 = vpack.c.bf16 %v571, %v570
  %v587 = vpack.c.bf16 %v573, %v572
  %v588 = vpack.c.bf16 %v575, %v574
  %v589 = vpack.c.bf16 %v577, %v576
  %v590 = vpack.c.bf16 %v579, %v578
  %v591 = vpack.c.bf16 %v581, %v580
  %v592 = vpack.c.bf16 %v583, %v582
  %v593 = vpack.c.bf16 %v585, %v584
  %v594 = vld [vmem:[%s2] sm:$0xf]
  %v595 = vld [vmem:[%s2 + $0x4] sm:$0xf]
  %v596 = vld [vmem:[%s2 + $0x8] sm:$0xf]
  %v597 = vld [vmem:[%s2 + $0xc] sm:$0xf]
  %s598 = scalar_lea.vmem %s2, 16
  %v599 = vld [vmem:[%s598] sm:$0xf]
  %v600 = vld [vmem:[%s598 + $0x4] sm:$0xf]
  %v601 = vld [vmem:[%s598 + $0x8] sm:$0xf]
  %v602 = vld [vmem:[%s598 + $0xc] sm:$0xf]
  %v607 = vunpack.c.l.b16 %v599
  %v608 = vunpack.c.l.b16 %v600
  %v609 = vunpack.c.l.b16 %v601
  %v610 = vunpack.c.l.b16 %v602
  %v611 = vpack.c.b16 %v608, %v607
  %v612 = vpack.c.b16 %v610, %v609
  %vm615 = vcmask 261120
  %v617 = vsel %vm615, %v588, 0
  %v620 = vsel %vm615, %v589, 0
  %622 = vmatprep.subr.bf16.mxu0 0
  %623 = vmatpush1.bf16.msra.mxu0 %v611
  %624 = vmatprep.subr.bf16.mxu0 0
  %625 = vmatpush1.bf16.msra.mxu0 %v612
  %626 = vmatprep.subr.bf16.mxu0 0
  %627 = vmatpush1.bf16.msra.mxu0 0
  %628 = vmatprep.subr.bf16.mxu0 0
  %629 = vmatpush1.bf16.msra.mxu0 0
  %630 = vmatprep.subr.bf16.mxu0 0
  %631 = vmatpush1.bf16.msra.mxu0 0
  %632 = vmatprep.subr.bf16.mxu0 0
  %633 = vmatpush1.bf16.msra.mxu0 0
  %634 = vmatprep.subr.bf16.mxu0 0
  %635 = vmatpush1.bf16.msra.mxu0 0
  %636 = vmatprep.subr.bf16.mxu0 0
  %637 = vmatpush1.bf16.msra.mxu0 0
  %638 = vmatprep.subr.bf16.mxu0 0
  %639 = vmatpush1.bf16.msra.mxu0 0
  %640 = vmatprep.subr.bf16.mxu0 0
  %641 = vmatpush1.bf16.msra.mxu0 0
  %642 = vmatprep.subr.bf16.mxu0 0
  %643 = vmatpush1.bf16.msra.mxu0 0
  %644 = vmatprep.subr.bf16.mxu0 0
  %645 = vmatpush1.bf16.msra.mxu0 0
  %646 = vmatprep.subr.bf16.mxu0 0
  %647 = vmatpush1.bf16.msra.mxu0 0
  %648 = vmatprep.subr.bf16.mxu0 0
  %649 = vmatpush1.bf16.msra.mxu0 0
  %650 = vmatprep.subr.bf16.mxu0 0
  %651 = vmatpush1.bf16.msra.mxu0 0
  %652 = vmatprep.subr.bf16.mxu0 0
  %653 = vmatpush1.bf16.msra.mxu0 0
  %654 = vmatprep.mubr.bf16.mxu0 0
  %655 = vmatmul.mubr.bf16.gmra.mrb[0].mxu0 %v617
  %v656 = vpop.f32.mrb[0].mxu0
  %v657 = vadd.f32 0.0, %v656
  %v658 = vpop.f32.mrb[0].mxu0
  %v659 = vpop.f32.mrb[0].mxu0
  %v660 = vadd.f32 0.0, %v659
  %v661 = vpop.f32.mrb[0].mxu0
  %662 = vmatprep.mubr.bf16.mxu0 0
  %663 = vmatmul.mubr.bf16.gmra.mrb[0].mxu0 %v620
  %v664 = vpop.f32.mrb[0].mxu0
  %v665 = vadd.f32 0.0, %v664
  %v666 = vpop.f32.mrb[0].mxu0
  %v667 = vpop.f32.mrb[0].mxu0
  %v668 = vadd.f32 0.0, %v667
  %v669 = vpop.f32.mrb[0].mxu0
  %670 = vdwg.mxu0
  %v675 = vunpack.c.l.b16 %v594
  %v676 = vunpack.c.l.b16 %v595
  %v677 = vunpack.c.l.b16 %v596
  %v678 = vunpack.c.l.b16 %v597
  %v679 = vpack.c.b16 %v676, %v675
  %v680 = vpack.c.b16 %v678, %v677
  %v684 = vsel %vm615, %v586, 0
  %v687 = vsel %vm615, %v587, 0
  %689 = vmatprep.subr.bf16.mxu0 0
  %690 = vmatpush1.bf16.msra.mxu0 %v679
  %691 = vmatprep.subr.bf16.mxu0 0
  %692 = vmatpush1.bf16.msra.mxu0 %v680
  %693 = vmatprep.subr.bf16.mxu0 0
  %694 = vmatpush1.bf16.msra.mxu0 0
  %695 = vmatprep.subr.bf16.mxu0 0
  %696 = vmatpush1.bf16.msra.mxu0 0
  %697 = vmatprep.subr.bf16.mxu0 0
  %698 = vmatpush1.bf16.msra.mxu0 0
  %699 = vmatprep.subr.bf16.mxu0 0
  %700 = vmatpush1.bf16.msra.mxu0 0
  %701 = vmatprep.subr.bf16.mxu0 0
  %702 = vmatpush1.bf16.msra.mxu0 0
  %703 = vmatprep.subr.bf16.mxu0 0
  %704 = vmatpush1.bf16.msra.mxu0 0
  %705 = vmatprep.subr.bf16.mxu0 0
  %706 = vmatpush1.bf16.msra.mxu0 0
  %707 = vmatprep.subr.bf16.mxu0 0
  %708 = vmatpush1.bf16.msra.mxu0 0
  %709 = vmatprep.subr.bf16.mxu0 0
  %710 = vmatpush1.bf16.msra.mxu0 0
  %711 = vmatprep.subr.bf16.mxu0 0
  %712 = vmatpush1.bf16.msra.mxu0 0
  %713 = vmatprep.subr.bf16.mxu0 0
  %714 = vmatpush1.bf16.msra.mxu0 0
  %715 = vmatprep.subr.bf16.mxu0 0
  %716 = vmatpush1.bf16.msra.mxu0 0
  %717 = vmatprep.subr.bf16.mxu0 0
  %718 = vmatpush1.bf16.msra.mxu0 0
  %719 = vmatprep.subr.bf16.mxu0 0
  %720 = vmatpush1.bf16.msra.mxu0 0
  %721 = vmatprep.mubr.bf16.mxu0 0
  %722 = vmatmul.mubr.bf16.gmra.mrb[0].mxu0 %v684
  %v723 = vpop.f32.mrb[0].mxu0
  %v724 = vadd.f32 %v657, %v723
  %v725 = vpop.f32.mrb[0].mxu0
  %v726 = vpop.f32.mrb[0].mxu0
  %v727 = vadd.f32 %v660, %v726
  %v728 = vpop.f32.mrb[0].mxu0
  %729 = vmatprep.mubr.bf16.mxu0 0
  %730 = vmatmul.mubr.bf16.gmra.mrb[0].mxu0 %v687
  %v731 = vpop.f32.mrb[0].mxu0
  %v732 = vadd.f32 %v665, %v731
  %v733 = vpop.f32.mrb[0].mxu0
  %v734 = vpop.f32.mrb[0].mxu0
  %v735 = vadd.f32 %v668, %v734
  %v736 = vpop.f32.mrb[0].mxu0
  %737 = vdwg.mxu0
  %s738 = scalar_lea.vmem %s2, 32
  %v739 = vld [vmem:[%s738] sm:$0xf]
  %v740 = vld [vmem:[%s738 + $0x4] sm:$0xf]
  %v741 = vld [vmem:[%s738 + $0x8] sm:$0xf]
  %v742 = vld [vmem:[%s738 + $0xc] sm:$0xf]
  %v747 = vunpack.c.l.b16 %v739
  %v748 = vunpack.c.l.b16 %v740
  %v749 = vunpack.c.l.b16 %v741
  %v750 = vunpack.c.l.b16 %v742
  %v751 = vpack.c.b16 %v748, %v747
  %v752 = vpack.c.b16 %v750, %v749
  %v756 = vsel %vm615, %v590, 0
  %v759 = vsel %vm615, %v591, 0
  %761 = vmatprep.subr.bf16.mxu0 0
  %762 = vmatpush1.bf16.msra.mxu0 %v751
  %763 = vmatprep.subr.bf16.mxu0 0
  %764 = vmatpush1.bf16.msra.mxu0 %v752
  %765 = vmatprep.subr.bf16.mxu0 0
  %766 = vmatpush1.bf16.msra.mxu0 0
  %767 = vmatprep.subr.bf16.mxu0 0
  %768 = vmatpush1.bf16.msra.mxu0 0
  %769 = vmatprep.subr.bf16.mxu0 0
  %770 = vmatpush1.bf16.msra.mxu0 0
  %771 = vmatprep.subr.bf16.mxu0 0
  %772 = vmatpush1.bf16.msra.mxu0 0
  %773 = vmatprep.subr.bf16.mxu0 0
  %774 = vmatpush1.bf16.msra.mxu0 0
  %775 = vmatprep.subr.bf16.mxu0 0
  %776 = vmatpush1.bf16.msra.mxu0 0
  %777 = vmatprep.subr.bf16.mxu0 0
  %778 = vmatpush1.bf16.msra.mxu0 0
  %779 = vmatprep.subr.bf16.mxu0 0
  %780 = vmatpush1.bf16.msra.mxu0 0
  %781 = vmatprep.subr.bf16.mxu0 0
  %782 = vmatpush1.bf16.msra.mxu0 0
  %783 = vmatprep.subr.bf16.mxu0 0
  %784 = vmatpush1.bf16.msra.mxu0 0
  %785 = vmatprep.subr.bf16.mxu0 0
  %786 = vmatpush1.bf16.msra.mxu0 0
  %787 = vmatprep.subr.bf16.mxu0 0
  %788 = vmatpush1.bf16.msra.mxu0 0
  %789 = vmatprep.subr.bf16.mxu0 0
  %790 = vmatpush1.bf16.msra.mxu0 0
  %791 = vmatprep.subr.bf16.mxu0 0
  %792 = vmatpush1.bf16.msra.mxu0 0
  %793 = vmatprep.mubr.bf16.mxu0 0
  %794 = vmatmul.mubr.bf16.gmra.mrb[0].mxu0 %v756
  %v795 = vpop.f32.mrb[0].mxu0
  %v796 = vadd.f32 0.0, %v795
  %v797 = vpop.f32.mrb[0].mxu0
  %v798 = vpop.f32.mrb[0].mxu0
  %v799 = vadd.f32 0.0, %v798
  %v800 = vpop.f32.mrb[0].mxu0
  %801 = vmatprep.mubr.bf16.mxu0 0
  %802 = vmatmul.mubr.bf16.gmra.mrb[0].mxu0 %v759
  %v803 = vpop.f32.mrb[0].mxu0
  %v804 = vadd.f32 0.0, %v803
  %v805 = vpop.f32.mrb[0].mxu0
  %v806 = vpop.f32.mrb[0].mxu0
  %v807 = vadd.f32 0.0, %v806
  %v808 = vpop.f32.mrb[0].mxu0
  %809 = vdwg.mxu0
  %v810 = vadd.f32 %v724, %v796
  %v811 = vadd.f32 %v727, %v799
  %v812 = vadd.f32 %v732, %v804
  %v813 = vadd.f32 %v735, %v807
  %s814 = scalar_lea.vmem %s2, 48
  %v815 = vld [vmem:[%s814] sm:$0xf]
  %v816 = vld [vmem:[%s814 + $0x4] sm:$0xf]
  %v817 = vld [vmem:[%s814 + $0x8] sm:$0xf]
  %v818 = vld [vmem:[%s814 + $0xc] sm:$0xf]
  %v823 = vunpack.c.l.b16 %v815
  %v824 = vunpack.c.l.b16 %v816
  %v825 = vunpack.c.l.b16 %v817
  %v826 = vunpack.c.l.b16 %v818
  %v827 = vpack.c.b16 %v824, %v823
  %v828 = vpack.c.b16 %v826, %v825
  %v832 = vsel %vm615, %v592, 0
  %v835 = vsel %vm615, %v593, 0
  %837 = vmatprep.subr.bf16.mxu0 0
  %838 = vmatpush1.bf16.msra.mxu0 %v827
  %839 = vmatprep.subr.bf16.mxu0 0
  %840 = vmatpush1.bf16.msra.mxu0 %v828
  %841 = vmatprep.subr.bf16.mxu0 0
  %842 = vmatpush1.bf16.msra.mxu0 0
  %843 = vmatprep.subr.bf16.mxu0 0
  %844 = vmatpush1.bf16.msra.mxu0 0
  %845 = vmatprep.subr.bf16.mxu0 0
  %846 = vmatpush1.bf16.msra.mxu0 0
  %847 = vmatprep.subr.bf16.mxu0 0
  %848 = vmatpush1.bf16.msra.mxu0 0
  %849 = vmatprep.subr.bf16.mxu0 0
  %850 = vmatpush1.bf16.msra.mxu0 0
  %851 = vmatprep.subr.bf16.mxu0 0
  %852 = vmatpush1.bf16.msra.mxu0 0
  %853 = vmatprep.subr.bf16.mxu0 0
  %854 = vmatpush1.bf16.msra.mxu0 0
  %855 = vmatprep.subr.bf16.mxu0 0
  %856 = vmatpush1.bf16.msra.mxu0 0
  %857 = vmatprep.subr.bf16.mxu0 0
  %858 = vmatpush1.bf16.msra.mxu0 0
  %859 = vmatprep.subr.bf16.mxu0 0
  %860 = vmatpush1.bf16.msra.mxu0 0
  %861 = vmatprep.subr.bf16.mxu0 0
  %862 = vmatpush1.bf16.msra.mxu0 0
  %863 = vmatprep.subr.bf16.mxu0 0
  %864 = vmatpush1.bf16.msra.mxu0 0
  %865 = vmatprep.subr.bf16.mxu0 0
  %866 = vmatpush1.bf16.msra.mxu0 0
  %867 = vmatprep.subr.bf16.mxu0 0
  %868 = vmatpush1.bf16.msra.mxu0 0
  %869 = vmatprep.mubr.bf16.mxu0 0
  %870 = vmatmul.mubr.bf16.gmra.mrb[0].mxu0 %v832
  %v871 = vpop.f32.mrb[0].mxu0
  %v872 = vadd.f32 0.0, %v871
  %v873 = vpop.f32.mrb[0].mxu0
  %v874 = vpop.f32.mrb[0].mxu0
  %v875 = vadd.f32 0.0, %v874
  %v876 = vpop.f32.mrb[0].mxu0
  %877 = vmatprep.mubr.bf16.mxu0 0
  %878 = vmatmul.mubr.bf16.gmra.mrb[0].mxu0 %v835
  %v879 = vpop.f32.mrb[0].mxu0
  %v880 = vadd.f32 0.0, %v879
  %v881 = vpop.f32.mrb[0].mxu0
  %v882 = vpop.f32.mrb[0].mxu0
  %v883 = vadd.f32 0.0, %v882
  %v884 = vpop.f32.mrb[0].mxu0
  %885 = vdwg.mxu0
  %v886 = vadd.f32 %v810, %v872
  %v887 = vadd.f32 %v811, %v875
  %v888 = vadd.f32 %v812, %v880
  %v889 = vadd.f32 %v813, %v883
  %v890 = vmax.f32 %v886, 0.0
  %v891 = vmax.f32 %v887, 0.0
  %v892 = vmax.f32 %v888, 0.0
  %v893 = vmax.f32 %v889, 0.0
  %v894 = vpack.c.bf16 %v891, %v890
  %v895 = vpack.c.bf16 %v893, %v892
  %898 = vrot.lane.b32.xlu0 %v894, 96
  %v899 = vpop.permute.xlu0 %898
  %900 = vrot.lane.b32.xlu0 %v895, 96
  %v901 = vpop.permute.xlu0 %900
  %904 = vrot.lane.b32.xlu0 %v894, 64
  %v905 = vpop.permute.xlu0 %904
  %906 = vrot.lane.b32.xlu0 %v895, 64
  %v907 = vpop.permute.xlu0 %906
  %910 = vrot.lane.b32.xlu0 %v894, 32
  %v911 = vpop.permute.xlu0 %910
  %912 = vrot.lane.b32.xlu0 %v895, 32
  %v913 = vpop.permute.xlu0 %912
  %v916 = vld [vmem:[%s3] sm:$0xf]
  %v917 = vld [vmem:[%s3 + $0x4] sm:$0xf]
  %v918 = vld [vmem:[%s3 + $0x8] sm:$0xf]
  %v919 = vld [vmem:[%s3 + $0xc] sm:$0xf]
  %v920 = vld [vmem:[%s3 + $0x10] sm:$0xf]
  %v921 = vld [vmem:[%s3 + $0x14] sm:$0xf]
  %v922 = vld [vmem:[%s3 + $0x18] sm:$0xf]
  %v923 = vld [vmem:[%s3 + $0x1c] sm:$0xf]
  %v924 = vld [vmem:[%s3 + $0x20] sm:$0xf]
  %v925 = vld [vmem:[%s3 + $0x24] sm:$0xf]
  %v926 = vld [vmem:[%s3 + $0x28] sm:$0xf]
  %v927 = vld [vmem:[%s3 + $0x2c] sm:$0xf]
  %v928 = vld [vmem:[%s3 + $0x30] sm:$0xf]
  %v929 = vld [vmem:[%s3 + $0x34] sm:$0xf]
  %v930 = vld [vmem:[%s3 + $0x38] sm:$0xf]
  %v931 = vld [vmem:[%s3 + $0x3c] sm:$0xf]
  %v932 = vld [vmem:[%s3 + $0x40] sm:$0xf]
  %v933 = vld [vmem:[%s3 + $0x44] sm:$0xf]
  %v934 = vld [vmem:[%s3 + $0x48] sm:$0xf]
  %v935 = vld [vmem:[%s3 + $0x4c] sm:$0xf]
  %v936 = vld [vmem:[%s3 + $0x50] sm:$0xf]
  %v937 = vld [vmem:[%s3 + $0x54] sm:$0xf]
  %v938 = vld [vmem:[%s3 + $0x58] sm:$0xf]
  %v939 = vld [vmem:[%s3 + $0x5c] sm:$0xf]
  %v940 = vld [vmem:[%s3 + $0x60] sm:$0xf]
  %v941 = vld [vmem:[%s3 + $0x64] sm:$0xf]
  %v942 = vld [vmem:[%s3 + $0x68] sm:$0xf]
  %v943 = vld [vmem:[%s3 + $0x6c] sm:$0xf]
  %v944 = vld [vmem:[%s3 + $0x70] sm:$0xf]
  %v945 = vld [vmem:[%s3 + $0x74] sm:$0xf]
  %v946 = vld [vmem:[%s3 + $0x78] sm:$0xf]
  %v947 = vld [vmem:[%s3 + $0x7c] sm:$0xf]
  %v948 = vld [vmem:[%s3 + $0x80] sm:$0xf]
  %v949 = vld [vmem:[%s3 + $0x84] sm:$0xf]
  %v950 = vld [vmem:[%s3 + $0x88] sm:$0xf]
  %v951 = vld [vmem:[%s3 + $0x8c] sm:$0xf]
  %v952 = vld [vmem:[%s3 + $0x90] sm:$0xf]
  %v953 = vld [vmem:[%s3 + $0x94] sm:$0xf]
  %v954 = vld [vmem:[%s3 + $0x98] sm:$0xf]
  %v955 = vld [vmem:[%s3 + $0x9c] sm:$0xf]
  %v956 = vld [vmem:[%s3 + $0xa0] sm:$0xf]
  %v957 = vld [vmem:[%s3 + $0xa4] sm:$0xf]
  %v958 = vld [vmem:[%s3 + $0xa8] sm:$0xf]
  %v959 = vld [vmem:[%s3 + $0xac] sm:$0xf]
  %v960 = vld [vmem:[%s3 + $0xb0] sm:$0xf]
  %v961 = vld [vmem:[%s3 + $0xb4] sm:$0xf]
  %v962 = vld [vmem:[%s3 + $0xb8] sm:$0xf]
  %v963 = vld [vmem:[%s3 + $0xbc] sm:$0xf]
  %v964 = vld [vmem:[%s3 + $0xc0] sm:$0xf]
  %v965 = vld [vmem:[%s3 + $0xc4] sm:$0xf]
  %v966 = vld [vmem:[%s3 + $0xc8] sm:$0xf]
  %v967 = vld [vmem:[%s3 + $0xcc] sm:$0xf]
  %v968 = vld [vmem:[%s3 + $0xd0] sm:$0xf]
  %v969 = vld [vmem:[%s3 + $0xd4] sm:$0xf]
  %v970 = vld [vmem:[%s3 + $0xd8] sm:$0xf]
  %v971 = vld [vmem:[%s3 + $0xdc] sm:$0xf]
  %v972 = vld [vmem:[%s3 + $0xe0] sm:$0xf]
  %v973 = vld [vmem:[%s3 + $0xe4] sm:$0xf]
  %v974 = vld [vmem:[%s3 + $0xe8] sm:$0xf]
  %v975 = vld [vmem:[%s3 + $0xec] sm:$0xf]
  %v976 = vld [vmem:[%s3 + $0xf0] sm:$0xf]
  %v977 = vld [vmem:[%s3 + $0xf4] sm:$0xf]
  %v978 = vld [vmem:[%s3 + $0xf8] sm:$0xf]
  %v979 = vld [vmem:[%s3 + $0xfc] sm:$0xf]
  %v1044 = vunpack.c.l.b16 %v916
  %v1045 = vunpack.c.l.b16 %v917
  %v1046 = vunpack.c.l.b16 %v918
  %v1047 = vunpack.c.l.b16 %v919
  %v1048 = vunpack.c.l.b16 %v920
  %v1049 = vunpack.c.l.b16 %v921
  %v1050 = vunpack.c.l.b16 %v922
  %v1051 = vunpack.c.l.b16 %v923
  %v1052 = vunpack.c.l.b16 %v924
  %v1053 = vunpack.c.l.b16 %v925
  %v1054 = vunpack.c.l.b16 %v926
  %v1055 = vunpack.c.l.b16 %v927
  %v1056 = vunpack.c.l.b16 %v928
  %v1057 = vunpack.c.l.b16 %v929
  %v1058 = vunpack.c.l.b16 %v930
  %v1059 = vunpack.c.l.b16 %v931
  %v1060 = vunpack.c.l.b16 %v932
  %v1061 = vunpack.c.l.b16 %v933
  %v1062 = vunpack.c.l.b16 %v934
  %v1063 = vunpack.c.l.b16 %v935
  %v1064 = vunpack.c.l.b16 %v936
  %v1065 = vunpack.c.l.b16 %v937
  %v1066 = vunpack.c.l.b16 %v938
  %v1067 = vunpack.c.l.b16 %v939
  %v1068 = vunpack.c.l.b16 %v940
  %v1069 = vunpack.c.l.b16 %v941
  %v1070 = vunpack.c.l.b16 %v942
  %v1071 = vunpack.c.l.b16 %v943
  %v1072 = vunpack.c.l.b16 %v944
  %v1073 = vunpack.c.l.b16 %v945
  %v1074 = vunpack.c.l.b16 %v946
  %v1075 = vunpack.c.l.b16 %v947
  %v1076 = vunpack.c.l.b16 %v948
  %v1077 = vunpack.c.l.b16 %v949
  %v1078 = vunpack.c.l.b16 %v950
  %v1079 = vunpack.c.l.b16 %v951
  %v1080 = vunpack.c.l.b16 %v952
  %v1081 = vunpack.c.l.b16 %v953
  %v1082 = vunpack.c.l.b16 %v954
  %v1083 = vunpack.c.l.b16 %v955
  %v1084 = vunpack.c.l.b16 %v956
  %v1085 = vunpack.c.l.b16 %v957
  %v1086 = vunpack.c.l.b16 %v958
  %v1087 = vunpack.c.l.b16 %v959
  %v1088 = vunpack.c.l.b16 %v960
  %v1089 = vunpack.c.l.b16 %v961
  %v1090 = vunpack.c.l.b16 %v962
  %v1091 = vunpack.c.l.b16 %v963
  %v1092 = vunpack.c.l.b16 %v964
  %v1093 = vunpack.c.l.b16 %v965
  %v1094 = vunpack.c.l.b16 %v966
  %v1095 = vunpack.c.l.b16 %v967
  %v1096 = vunpack.c.l.b16 %v968
  %v1097 = vunpack.c.l.b16 %v969
  %v1098 = vunpack.c.l.b16 %v970
  %v1099 = vunpack.c.l.b16 %v971
  %v1100 = vunpack.c.l.b16 %v972
  %v1101 = vunpack.c.l.b16 %v973
  %v1102 = vunpack.c.l.b16 %v974
  %v1103 = vunpack.c.l.b16 %v975
  %v1104 = vunpack.c.l.b16 %v976
  %v1105 = vunpack.c.l.b16 %v977
  %v1106 = vunpack.c.l.b16 %v978
  %v1107 = vunpack.c.l.b16 %v979
  %v1108 = vpack.c.b16 %v1045, %v1044
  %v1109 = vpack.c.b16 %v1047, %v1046
  %v1110 = vpack.c.b16 %v1049, %v1048
  %v1111 = vpack.c.b16 %v1051, %v1050
  %v1112 = vpack.c.b16 %v1053, %v1052
  %v1113 = vpack.c.b16 %v1055, %v1054
  %v1114 = vpack.c.b16 %v1057, %v1056
  %v1115 = vpack.c.b16 %v1059, %v1058
  %v1116 = vpack.c.b16 %v1061, %v1060
  %v1117 = vpack.c.b16 %v1063, %v1062
  %v1118 = vpack.c.b16 %v1065, %v1064
  %v1119 = vpack.c.b16 %v1067, %v1066
  %v1120 = vpack.c.b16 %v1069, %v1068
  %v1121 = vpack.c.b16 %v1071, %v1070
  %v1122 = vpack.c.b16 %v1073, %v1072
  %v1123 = vpack.c.b16 %v1075, %v1074
  %v1124 = vpack.c.b16 %v1077, %v1076
  %v1125 = vpack.c.b16 %v1079, %v1078
  %v1126 = vpack.c.b16 %v1081, %v1080
  %v1127 = vpack.c.b16 %v1083, %v1082
  %v1128 = vpack.c.b16 %v1085, %v1084
  %v1129 = vpack.c.b16 %v1087, %v1086
  %v1130 = vpack.c.b16 %v1089, %v1088
  %v1131 = vpack.c.b16 %v1091, %v1090
  %v1132 = vpack.c.b16 %v1093, %v1092
  %v1133 = vpack.c.b16 %v1095, %v1094
  %v1134 = vpack.c.b16 %v1097, %v1096
  %v1135 = vpack.c.b16 %v1099, %v1098
  %v1136 = vpack.c.b16 %v1101, %v1100
  %v1137 = vpack.c.b16 %v1103, %v1102
  %v1138 = vpack.c.b16 %v1105, %v1104
  %v1139 = vpack.c.b16 %v1107, %v1106
  %1172 = vmatprep.subr.bf16.mxu0 0
  %1173 = vmatpush1.bf16.msra.mxu0 %v894
  %1174 = vmatprep.subr.bf16.mxu0 0
  %1175 = vmatpush1.bf16.msra.mxu0 %v895
  %1176 = vmatprep.subr.bf16.mxu0 0
  %1177 = vmatpush1.bf16.msra.mxu0 %v899
  %1178 = vmatprep.subr.bf16.mxu0 0
  %1179 = vmatpush1.bf16.msra.mxu0 %v901
  %1180 = vmatprep.subr.bf16.mxu0 0
  %1181 = vmatpush1.bf16.msra.mxu0 %v905
  %1182 = vmatprep.subr.bf16.mxu0 0
  %1183 = vmatpush1.bf16.msra.mxu0 %v907
  %1184 = vmatprep.subr.bf16.mxu0 0
  %1185 = vmatpush1.bf16.msra.mxu0 %v911
  %1186 = vmatprep.subr.bf16.mxu0 0
  %1187 = vmatpush1.bf16.msra.mxu0 %v913
  %1188 = vmatprep.subr.bf16.mxu0 0
  %1189 = vmatpush1.bf16.msra.mxu0 0
  %1190 = vmatprep.subr.bf16.mxu0 0
  %1191 = vmatpush1.bf16.msra.mxu0 0
  %1192 = vmatprep.subr.bf16.mxu0 0
  %1193 = vmatpush1.bf16.msra.mxu0 0
  %1194 = vmatprep.subr.bf16.mxu0 0
  %1195 = vmatpush1.bf16.msra.mxu0 0
  %1196 = vmatprep.subr.bf16.mxu0 0
  %1197 = vmatpush1.bf16.msra.mxu0 0
  %1198 = vmatprep.subr.bf16.mxu0 0
  %1199 = vmatpush1.bf16.msra.mxu0 0
  %1200 = vmatprep.subr.bf16.mxu0 0
  %1201 = vmatpush1.bf16.msra.mxu0 0
  %1202 = vmatprep.subr.bf16.mxu0 0
  %1203 = vmatpush1.bf16.msra.mxu0 0
  %1204 = vmatprep.mubr.bf16.mxu0 0
  %1205 = vmatmul.mubr.bf16.gmra.mrb[0].mxu0 %v1108
  %v1206 = vpop.f32.mrb[0].mxu0
  %v1207 = vadd.f32 0.0, %v1206
  %v1208 = vpop.f32.mrb[0].mxu0
  %v1209 = vpop.f32.mrb[0].mxu0
  %v1210 = vadd.f32 0.0, %v1209
  %v1211 = vpop.f32.mrb[0].mxu0
  %1212 = vmatprep.mubr.bf16.mxu0 0
  %1213 = vmatmul.mubr.bf16.gmra.mrb[0].mxu0 %v1109
  %v1214 = vpop.f32.mrb[0].mxu0
  %v1215 = vadd.f32 0.0, %v1214
  %v1216 = vpop.f32.mrb[0].mxu0
  %v1217 = vpop.f32.mrb[0].mxu0
  %v1218 = vadd.f32 0.0, %v1217
  %v1219 = vpop.f32.mrb[0].mxu0
  %1220 = vmatprep.mubr.bf16.mxu0 0
  %1221 = vmatmul.mubr.bf16.gmra.mrb[0].mxu0 %v1110
  %v1222 = vpop.f32.mrb[0].mxu0
  %v1223 = vadd.f32 0.0, %v1222
  %v1224 = vpop.f32.mrb[0].mxu0
  %v1225 = vpop.f32.mrb[0].mxu0
  %v1226 = vadd.f32 0.0, %v1225
  %v1227 = vpop.f32.mrb[0].mxu0
  %1228 = vmatprep.mubr.bf16.mxu0 0
  %1229 = vmatmul.mubr.bf16.gmra.mrb[0].mxu0 %v1111
  %v1230 = vpop.f32.mrb[0].mxu0
  %v1231 = vadd.f32 0.0, %v1230
  %v1232 = vpop.f32.mrb[0].mxu0
  %v1233 = vpop.f32.mrb[0].mxu0
  %v1234 = vadd.f32 0.0, %v1233
  %v1235 = vpop.f32.mrb[0].mxu0
  %1236 = vmatprep.mubr.bf16.mxu0 0
  %1237 = vmatmul.mubr.bf16.gmra.mrb[0].mxu0 %v1112
  %v1238 = vpop.f32.mrb[0].mxu0
  %v1239 = vadd.f32 0.0, %v1238
  %v1240 = vpop.f32.mrb[0].mxu0
  %v1241 = vpop.f32.mrb[0].mxu0
  %v1242 = vadd.f32 0.0, %v1241
  %v1243 = vpop.f32.mrb[0].mxu0
  %1244 = vmatprep.mubr.bf16.mxu0 0
  %1245 = vmatmul.mubr.bf16.gmra.mrb[0].mxu0 %v1113
  %v1246 = vpop.f32.mrb[0].mxu0
  %v1247 = vadd.f32 0.0, %v1246
  %v1248 = vpop.f32.mrb[0].mxu0
  %v1249 = vpop.f32.mrb[0].mxu0
  %v1250 = vadd.f32 0.0, %v1249
  %v1251 = vpop.f32.mrb[0].mxu0
  %1252 = vmatprep.mubr.bf16.mxu0 0
  %1253 = vmatmul.mubr.bf16.gmra.mrb[0].mxu0 %v1114
  %v1254 = vpop.f32.mrb[0].mxu0
  %v1255 = vadd.f32 0.0, %v1254
  %v1256 = vpop.f32.mrb[0].mxu0
  %v1257 = vpop.f32.mrb[0].mxu0
  %v1258 = vadd.f32 0.0, %v1257
  %v1259 = vpop.f32.mrb[0].mxu0
  %1260 = vmatprep.mubr.bf16.mxu0 0
  %1261 = vmatmul.mubr.bf16.gmra.mrb[0].mxu0 %v1115
  %v1262 = vpop.f32.mrb[0].mxu0
  %v1263 = vadd.f32 0.0, %v1262
  %v1264 = vpop.f32.mrb[0].mxu0
  %v1265 = vpop.f32.mrb[0].mxu0
  %v1266 = vadd.f32 0.0, %v1265
  %v1267 = vpop.f32.mrb[0].mxu0
  %1268 = vmatprep.mubr.bf16.mxu0 0
  %1269 = vmatmul.mubr.bf16.gmra.mrb[0].mxu0 %v1116
  %v1270 = vpop.f32.mrb[0].mxu0
  %v1271 = vadd.f32 0.0, %v1270
  %v1272 = vpop.f32.mrb[0].mxu0
  %v1273 = vpop.f32.mrb[0].mxu0
  %v1274 = vadd.f32 0.0, %v1273
  %v1275 = vpop.f32.mrb[0].mxu0
  %1276 = vmatprep.mubr.bf16.mxu0 0
  %1277 = vmatmul.mubr.bf16.gmra.mrb[0].mxu0 %v1117
  %v1278 = vpop.f32.mrb[0].mxu0
  %v1279 = vadd.f32 0.0, %v1278
  %v1280 = vpop.f32.mrb[0].mxu0
  %v1281 = vpop.f32.mrb[0].mxu0
  %v1282 = vadd.f32 0.0, %v1281
  %v1283 = vpop.f32.mrb[0].mxu0
  %1284 = vmatprep.mubr.bf16.mxu0 0
  %1285 = vmatmul.mubr.bf16.gmra.mrb[0].mxu0 %v1118
  %v1286 = vpop.f32.mrb[0].mxu0
  %v1287 = vadd.f32 0.0, %v1286
  %v1288 = vpop.f32.mrb[0].mxu0
  %v1289 = vpop.f32.mrb[0].mxu0
  %v1290 = vadd.f32 0.0, %v1289
  %v1291 = vpop.f32.mrb[0].mxu0
  %1292 = vmatprep.mubr.bf16.mxu0 0
  %1293 = vmatmul.mubr.bf16.gmra.mrb[0].mxu0 %v1119
  %v1294 = vpop.f32.mrb[0].mxu0
  %v1295 = vadd.f32 0.0, %v1294
  %v1296 = vpop.f32.mrb[0].mxu0
  %v1297 = vpop.f32.mrb[0].mxu0
  %v1298 = vadd.f32 0.0, %v1297
  %v1299 = vpop.f32.mrb[0].mxu0
  %1300 = vmatprep.mubr.bf16.mxu0 0
  %1301 = vmatmul.mubr.bf16.gmra.mrb[0].mxu0 %v1120
  %v1302 = vpop.f32.mrb[0].mxu0
  %v1303 = vadd.f32 0.0, %v1302
  %v1304 = vpop.f32.mrb[0].mxu0
  %v1305 = vpop.f32.mrb[0].mxu0
  %v1306 = vadd.f32 0.0, %v1305
  %v1307 = vpop.f32.mrb[0].mxu0
  %1308 = vmatprep.mubr.bf16.mxu0 0
  %1309 = vmatmul.mubr.bf16.gmra.mrb[0].mxu0 %v1121
  %v1310 = vpop.f32.mrb[0].mxu0
  %v1311 = vadd.f32 0.0, %v1310
  %v1312 = vpop.f32.mrb[0].mxu0
  %v1313 = vpop.f32.mrb[0].mxu0
  %v1314 = vadd.f32 0.0, %v1313
  %v1315 = vpop.f32.mrb[0].mxu0
  %1316 = vmatprep.mubr.bf16.mxu0 0
  %1317 = vmatmul.mubr.bf16.gmra.mrb[0].mxu0 %v1122
  %v1318 = vpop.f32.mrb[0].mxu0
  %v1319 = vadd.f32 0.0, %v1318
  %v1320 = vpop.f32.mrb[0].mxu0
  %v1321 = vpop.f32.mrb[0].mxu0
  %v1322 = vadd.f32 0.0, %v1321
  %v1323 = vpop.f32.mrb[0].mxu0
  %1324 = vmatprep.mubr.bf16.mxu0 0
  %1325 = vmatmul.mubr.bf16.gmra.mrb[0].mxu0 %v1123
  %v1326 = vpop.f32.mrb[0].mxu0
  %v1327 = vadd.f32 0.0, %v1326
  %v1328 = vpop.f32.mrb[0].mxu0
  %v1329 = vpop.f32.mrb[0].mxu0
  %v1330 = vadd.f32 0.0, %v1329
  %v1331 = vpop.f32.mrb[0].mxu0
  %1332 = vmatprep.mubr.bf16.mxu0 0
  %1333 = vmatmul.mubr.bf16.gmra.mrb[0].mxu0 %v1124
  %v1334 = vpop.f32.mrb[0].mxu0
  %v1335 = vadd.f32 0.0, %v1334
  %v1336 = vpop.f32.mrb[0].mxu0
  %v1337 = vpop.f32.mrb[0].mxu0
  %v1338 = vadd.f32 0.0, %v1337
  %v1339 = vpop.f32.mrb[0].mxu0
  %1340 = vmatprep.mubr.bf16.mxu0 0
  %1341 = vmatmul.mubr.bf16.gmra.mrb[0].mxu0 %v1125
  %v1342 = vpop.f32.mrb[0].mxu0
  %v1343 = vadd.f32 0.0, %v1342
  %v1344 = vpop.f32.mrb[0].mxu0
  %v1345 = vpop.f32.mrb[0].mxu0
  %v1346 = vadd.f32 0.0, %v1345
  %v1347 = vpop.f32.mrb[0].mxu0
  %1348 = vmatprep.mubr.bf16.mxu0 0
  %1349 = vmatmul.mubr.bf16.gmra.mrb[0].mxu0 %v1126
  %v1350 = vpop.f32.mrb[0].mxu0
  %v1351 = vadd.f32 0.0, %v1350
  %v1352 = vpop.f32.mrb[0].mxu0
  %v1353 = vpop.f32.mrb[0].mxu0
  %v1354 = vadd.f32 0.0, %v1353
  %v1355 = vpop.f32.mrb[0].mxu0
  %1356 = vmatprep.mubr.bf16.mxu0 0
  %1357 = vmatmul.mubr.bf16.gmra.mrb[0].mxu0 %v1127
  %v1358 = vpop.f32.mrb[0].mxu0
  %v1359 = vadd.f32 0.0, %v1358
  %v1360 = vpop.f32.mrb[0].mxu0
  %v1361 = vpop.f32.mrb[0].mxu0
  %v1362 = vadd.f32 0.0, %v1361
  %v1363 = vpop.f32.mrb[0].mxu0
  %1364 = vmatprep.mubr.bf16.mxu0 0
  %1365 = vmatmul.mubr.bf16.gmra.mrb[0].mxu0 %v1128
  %v1366 = vpop.f32.mrb[0].mxu0
  %v1367 = vadd.f32 0.0, %v1366
  %v1368 = vpop.f32.mrb[0].mxu0
  %v1369 = vpop.f32.mrb[0].mxu0
  %v1370 = vadd.f32 0.0, %v1369
  %v1371 = vpop.f32.mrb[0].mxu0
  %1372 = vmatprep.mubr.bf16.mxu0 0
  %1373 = vmatmul.mubr.bf16.gmra.mrb[0].mxu0 %v1129
  %v1374 = vpop.f32.mrb[0].mxu0
  %v1375 = vadd.f32 0.0, %v1374
  %v1376 = vpop.f32.mrb[0].mxu0
  %v1377 = vpop.f32.mrb[0].mxu0
  %v1378 = vadd.f32 0.0, %v1377
  %v1379 = vpop.f32.mrb[0].mxu0
  %1380 = vmatprep.mubr.bf16.mxu0 0
  %1381 = vmatmul.mubr.bf16.gmra.mrb[0].mxu0 %v1130
  %v1382 = vpop.f32.mrb[0].mxu0
  %v1383 = vadd.f32 0.0, %v1382
  %v1384 = vpop.f32.mrb[0].mxu0
  %v1385 = vpop.f32.mrb[0].mxu0
  %v1386 = vadd.f32 0.0, %v1385
  %v1387 = vpop.f32.mrb[0].mxu0
  %1388 = vmatprep.mubr.bf16.mxu0 0
  %1389 = vmatmul.mubr.bf16.gmra.mrb[0].mxu0 %v1131
  %v1390 = vpop.f32.mrb[0].mxu0
  %v1391 = vadd.f32 0.0, %v1390
  %v1392 = vpop.f32.mrb[0].mxu0
  %v1393 = vpop.f32.mrb[0].mxu0
  %v1394 = vadd.f32 0.0, %v1393
  %v1395 = vpop.f32.mrb[0].mxu0
  %1396 = vmatprep.mubr.bf16.mxu0 0
  %1397 = vmatmul.mubr.bf16.gmra.mrb[0].mxu0 %v1132
  %v1398 = vpop.f32.mrb[0].mxu0
  %v1399 = vadd.f32 0.0, %v1398
  %v1400 = vpop.f32.mrb[0].mxu0
  %v1401 = vpop.f32.mrb[0].mxu0
  %v1402 = vadd.f32 0.0, %v1401
  %v1403 = vpop.f32.mrb[0].mxu0
  %1404 = vmatprep.mubr.bf16.mxu0 0
  %1405 = vmatmul.mubr.bf16.gmra.mrb[0].mxu0 %v1133
  %v1406 = vpop.f32.mrb[0].mxu0
  %v1407 = vadd.f32 0.0, %v1406
  %v1408 = vpop.f32.mrb[0].mxu0
  %v1409 = vpop.f32.mrb[0].mxu0
  %v1410 = vadd.f32 0.0, %v1409
  %v1411 = vpop.f32.mrb[0].mxu0
  %1412 = vmatprep.mubr.bf16.mxu0 0
  %1413 = vmatmul.mubr.bf16.gmra.mrb[0].mxu0 %v1134
  %v1414 = vpop.f32.mrb[0].mxu0
  %v1415 = vadd.f32 0.0, %v1414
  %v1416 = vpop.f32.mrb[0].mxu0
  %v1417 = vpop.f32.mrb[0].mxu0
  %v1418 = vadd.f32 0.0, %v1417
  %v1419 = vpop.f32.mrb[0].mxu0
  %1420 = vmatprep.mubr.bf16.mxu0 0
  %1421 = vmatmul.mubr.bf16.gmra.mrb[0].mxu0 %v1135
  %v1422 = vpop.f32.mrb[0].mxu0
  %v1423 = vadd.f32 0.0, %v1422
  %v1424 = vpop.f32.mrb[0].mxu0
  %v1425 = vpop.f32.mrb[0].mxu0
  %v1426 = vadd.f32 0.0, %v1425
  %v1427 = vpop.f32.mrb[0].mxu0
  %1428 = vmatprep.mubr.bf16.mxu0 0
  %1429 = vmatmul.mubr.bf16.gmra.mrb[0].mxu0 %v1136
  %v1430 = vpop.f32.mrb[0].mxu0
  %v1431 = vadd.f32 0.0, %v1430
  %v1432 = vpop.f32.mrb[0].mxu0
  %v1433 = vpop.f32.mrb[0].mxu0
  %v1434 = vadd.f32 0.0, %v1433
  %v1435 = vpop.f32.mrb[0].mxu0
  %1436 = vmatprep.mubr.bf16.mxu0 0
  %1437 = vmatmul.mubr.bf16.gmra.mrb[0].mxu0 %v1137
  %v1438 = vpop.f32.mrb[0].mxu0
  %v1439 = vadd.f32 0.0, %v1438
  %v1440 = vpop.f32.mrb[0].mxu0
  %v1441 = vpop.f32.mrb[0].mxu0
  %v1442 = vadd.f32 0.0, %v1441
  %v1443 = vpop.f32.mrb[0].mxu0
  %1444 = vmatprep.mubr.bf16.mxu0 0
  %1445 = vmatmul.mubr.bf16.gmra.mrb[0].mxu0 %v1138
  %v1446 = vpop.f32.mrb[0].mxu0
  %v1447 = vadd.f32 0.0, %v1446
  %v1448 = vpop.f32.mrb[0].mxu0
  %v1449 = vpop.f32.mrb[0].mxu0
  %v1450 = vadd.f32 0.0, %v1449
  %v1451 = vpop.f32.mrb[0].mxu0
  %1452 = vmatprep.mubr.bf16.mxu0 0
  %1453 = vmatmul.mubr.bf16.gmra.mrb[0].mxu0 %v1139
  %v1454 = vpop.f32.mrb[0].mxu0
  %v1455 = vadd.f32 0.0, %v1454
  %v1456 = vpop.f32.mrb[0].mxu0
  %v1457 = vpop.f32.mrb[0].mxu0
  %v1458 = vadd.f32 0.0, %v1457
  %v1459 = vpop.f32.mrb[0].mxu0
  %1460 = vdwg.mxu0
  %v1461 = vpack.c.bf16 %v1210, %v1207
  %v1462 = vpack.c.bf16 %v1218, %v1215
  %v1463 = vpack.c.bf16 %v1226, %v1223
  %v1464 = vpack.c.bf16 %v1234, %v1231
  %v1465 = vpack.c.bf16 %v1242, %v1239
  %v1466 = vpack.c.bf16 %v1250, %v1247
  %v1467 = vpack.c.bf16 %v1258, %v1255
  %v1468 = vpack.c.bf16 %v1266, %v1263
  %v1469 = vpack.c.bf16 %v1274, %v1271
  %v1470 = vpack.c.bf16 %v1282, %v1279
  %v1471 = vpack.c.bf16 %v1290, %v1287
  %v1472 = vpack.c.bf16 %v1298, %v1295
  %v1473 = vpack.c.bf16 %v1306, %v1303
  %v1474 = vpack.c.bf16 %v1314, %v1311
  %v1475 = vpack.c.bf16 %v1322, %v1319
  %v1476 = vpack.c.bf16 %v1330, %v1327
  %v1477 = vpack.c.bf16 %v1338, %v1335
  %v1478 = vpack.c.bf16 %v1346, %v1343
  %v1479 = vpack.c.bf16 %v1354, %v1351
  %v1480 = vpack.c.bf16 %v1362, %v1359
  %v1481 = vpack.c.bf16 %v1370, %v1367
  %v1482 = vpack.c.bf16 %v1378, %v1375
  %v1483 = vpack.c.bf16 %v1386, %v1383
  %v1484 = vpack.c.bf16 %v1394, %v1391
  %v1485 = vpack.c.bf16 %v1402, %v1399
  %v1486 = vpack.c.bf16 %v1410, %v1407
  %v1487 = vpack.c.bf16 %v1418, %v1415
  %v1488 = vpack.c.bf16 %v1426, %v1423
  %v1489 = vpack.c.bf16 %v1434, %v1431
  %v1490 = vpack.c.bf16 %v1442, %v1439
  %v1491 = vpack.c.bf16 %v1450, %v1447
  %v1492 = vpack.c.bf16 %v1458, %v1455
  %v1493 = vld [vmem:[%s4] sm:$0xf]
  %v1494 = vld [vmem:[%s4 + $0x4] sm:$0xf]
  %v1495 = vld [vmem:[%s4 + $0x8] sm:$0xf]
  %v1496 = vld [vmem:[%s4 + $0xc] sm:$0xf]
  %s1497 = scalar_lea.vmem %s4, 16
  %v1498 = vld [vmem:[%s1497] sm:$0xf]
  %v1499 = vld [vmem:[%s1497 + $0x4] sm:$0xf]
  %v1500 = vld [vmem:[%s1497 + $0x8] sm:$0xf]
  %v1501 = vld [vmem:[%s1497 + $0xc] sm:$0xf]
  %v1506 = vunpack.c.l.b16 %v1498
  %v1507 = vunpack.c.l.b16 %v1499
  %v1508 = vunpack.c.l.b16 %v1500
  %v1509 = vunpack.c.l.b16 %v1501
  %v1510 = vpack.c.b16 %v1507, %v1506
  %v1511 = vpack.c.b16 %v1509, %v1508
  %v1515 = vsel %vm615, %v1469, 0
  %v1518 = vsel %vm615, %v1470, 0
  %v1521 = vsel %vm615, %v1471, 0
  %v1524 = vsel %vm615, %v1472, 0
  %v1527 = vsel %vm615, %v1473, 0
  %v1530 = vsel %vm615, %v1474, 0
  %v1533 = vsel %vm615, %v1475, 0
  %v1536 = vsel %vm615, %v1476, 0
  %1538 = vmatprep.subr.bf16.mxu0 0
  %1539 = vmatpush1.bf16.msra.mxu0 %v1510
  %1540 = vmatprep.subr.bf16.mxu0 0
  %1541 = vmatpush1.bf16.msra.mxu0 %v1511
  %1542 = vmatprep.subr.bf16.mxu0 0
  %1543 = vmatpush1.bf16.msra.mxu0 0
  %1544 = vmatprep.subr.bf16.mxu0 0
  %1545 = vmatpush1.bf16.msra.mxu0 0
  %1546 = vmatprep.subr.bf16.mxu0 0
  %1547 = vmatpush1.bf16.msra.mxu0 0
  %1548 = vmatprep.subr.bf16.mxu0 0
  %1549 = vmatpush1.bf16.msra.mxu0 0
  %1550 = vmatprep.subr.bf16.mxu0 0
  %1551 = vmatpush1.bf16.msra.mxu0 0
  %1552 = vmatprep.subr.bf16.mxu0 0
  %1553 = vmatpush1.bf16.msra.mxu0 0
  %1554 = vmatprep.subr.bf16.mxu0 0
  %1555 = vmatpush1.bf16.msra.mxu0 0
  %1556 = vmatprep.subr.bf16.mxu0 0
  %1557 = vmatpush1.bf16.msra.mxu0 0
  %1558 = vmatprep.subr.bf16.mxu0 0
  %1559 = vmatpush1.bf16.msra.mxu0 0
  %1560 = vmatprep.subr.bf16.mxu0 0
  %1561 = vmatpush1.bf16.msra.mxu0 0
  %1562 = vmatprep.subr.bf16.mxu0 0
  %1563 = vmatpush1.bf16.msra.mxu0 0
  %1564 = vmatprep.subr.bf16.mxu0 0
  %1565 = vmatpush1.bf16.msra.mxu0 0
  %1566 = vmatprep.subr.bf16.mxu0 0
  %1567 = vmatpush1.bf16.msra.mxu0 0
  %1568 = vmatprep.subr.bf16.mxu0 0
  %1569 = vmatpush1.bf16.msra.mxu0 0
  %1570 = vmatprep.mubr.bf16.mxu0 0
  %1571 = vmatmul.mubr.bf16.gmra.mrb[0].mxu0 %v1515
  %v1572 = vpop.f32.mrb[0].mxu0
  %v1573 = vadd.f32 0.0, %v1572
  %v1574 = vpop.f32.mrb[0].mxu0
  %v1575 = vpop.f32.mrb[0].mxu0
  %v1576 = vadd.f32 0.0, %v1575
  %v1577 = vpop.f32.mrb[0].mxu0
  %1578 = vmatprep.mubr.bf16.mxu0 0
  %1579 = vmatmul.mubr.bf16.gmra.mrb[0].mxu0 %v1518
  %v1580 = vpop.f32.mrb[0].mxu0
  %v1581 = vadd.f32 0.0, %v1580
  %v1582 = vpop.f32.mrb[0].mxu0
  %v1583 = vpop.f32.mrb[0].mxu0
  %v1584 = vadd.f32 0.0, %v1583
  %v1585 = vpop.f32.mrb[0].mxu0
  %1586 = vmatprep.mubr.bf16.mxu0 0
  %1587 = vmatmul.mubr.bf16.gmra.mrb[0].mxu0 %v1521
  %v1588 = vpop.f32.mrb[0].mxu0
  %v1589 = vadd.f32 0.0, %v1588
  %v1590 = vpop.f32.mrb[0].mxu0
  %v1591 = vpop.f32.mrb[0].mxu0
  %v1592 = vadd.f32 0.0, %v1591
  %v1593 = vpop.f32.mrb[0].mxu0
  %1594 = vmatprep.mubr.bf16.mxu0 0
  %1595 = vmatmul.mubr.bf16.gmra.mrb[0].mxu0 %v1524
  %v1596 = vpop.f32.mrb[0].mxu0
  %v1597 = vadd.f32 0.0, %v1596
  %v1598 = vpop.f32.mrb[0].mxu0
  %v1599 = vpop.f32.mrb[0].mxu0
  %v1600 = vadd.f32 0.0, %v1599
  %v1601 = vpop.f32.mrb[0].mxu0
  %1602 = vmatprep.mubr.bf16.mxu0 0
  %1603 = vmatmul.mubr.bf16.gmra.mrb[0].mxu0 %v1527
  %v1604 = vpop.f32.mrb[0].mxu0
  %v1605 = vadd.f32 0.0, %v1604
  %v1606 = vpop.f32.mrb[0].mxu0
  %v1607 = vpop.f32.mrb[0].mxu0
  %v1608 = vadd.f32 0.0, %v1607
  %v1609 = vpop.f32.mrb[0].mxu0
  %1610 = vmatprep.mubr.bf16.mxu0 0
  %1611 = vmatmul.mubr.bf16.gmra.mrb[0].mxu0 %v1530
  %v1612 = vpop.f32.mrb[0].mxu0
  %v1613 = vadd.f32 0.0, %v1612
  %v1614 = vpop.f32.mrb[0].mxu0
  %v1615 = vpop.f32.mrb[0].mxu0
  %v1616 = vadd.f32 0.0, %v1615
  %v1617 = vpop.f32.mrb[0].mxu0
  %1618 = vmatprep.mubr.bf16.mxu0 0
  %1619 = vmatmul.mubr.bf16.gmra.mrb[0].mxu0 %v1533
  %v1620 = vpop.f32.mrb[0].mxu0
  %v1621 = vadd.f32 0.0, %v1620
  %v1622 = vpop.f32.mrb[0].mxu0
  %v1623 = vpop.f32.mrb[0].mxu0
  %v1624 = vadd.f32 0.0, %v1623
  %v1625 = vpop.f32.mrb[0].mxu0
  %1626 = vmatprep.mubr.bf16.mxu0 0
  %1627 = vmatmul.mubr.bf16.gmra.mrb[0].mxu0 %v1536
  %v1628 = vpop.f32.mrb[0].mxu0
  %v1629 = vadd.f32 0.0, %v1628
  %v1630 = vpop.f32.mrb[0].mxu0
  %v1631 = vpop.f32.mrb[0].mxu0
  %v1632 = vadd.f32 0.0, %v1631
  %v1633 = vpop.f32.mrb[0].mxu0
  %1634 = vdwg.mxu0
  %v1639 = vunpack.c.l.b16 %v1493
  %v1640 = vunpack.c.l.b16 %v1494
  %v1641 = vunpack.c.l.b16 %v1495
  %v1642 = vunpack.c.l.b16 %v1496
  %v1643 = vpack.c.b16 %v1640, %v1639
  %v1644 = vpack.c.b16 %v1642, %v1641
  %v1648 = vsel %vm615, %v1461, 0
  %v1651 = vsel %vm615, %v1462, 0
  %v1654 = vsel %vm615, %v1463, 0
  %v1657 = vsel %vm615, %v1464, 0
  %v1660 = vsel %vm615, %v1465, 0
  %v1663 = vsel %vm615, %v1466, 0
  %v1666 = vsel %vm615, %v1467, 0
  %v1669 = vsel %vm615, %v1468, 0
  %1671 = vmatprep.subr.bf16.mxu0 0
  %1672 = vmatpush1.bf16.msra.mxu0 %v1643
  %1673 = vmatprep.subr.bf16.mxu0 0
  %1674 = vmatpush1.bf16.msra.mxu0 %v1644
  %1675 = vmatprep.subr.bf16.mxu0 0
  %1676 = vmatpush1.bf16.msra.mxu0 0
  %1677 = vmatprep.subr.bf16.mxu0 0
  %1678 = vmatpush1.bf16.msra.mxu0 0
  %1679 = vmatprep.subr.bf16.mxu0 0
  %1680 = vmatpush1.bf16.msra.mxu0 0
  %1681 = vmatprep.subr.bf16.mxu0 0
  %1682 = vmatpush1.bf16.msra.mxu0 0
  %1683 = vmatprep.subr.bf16.mxu0 0
  %1684 = vmatpush1.bf16.msra.mxu0 0
  %1685 = vmatprep.subr.bf16.mxu0 0
  %1686 = vmatpush1.bf16.msra.mxu0 0
  %1687 = vmatprep.subr.bf16.mxu0 0
  %1688 = vmatpush1.bf16.msra.mxu0 0
  %1689 = vmatprep.subr.bf16.mxu0 0
  %1690 = vmatpush1.bf16.msra.mxu0 0
  %1691 = vmatprep.subr.bf16.mxu0 0
  %1692 = vmatpush1.bf16.msra.mxu0 0
  %1693 = vmatprep.subr.bf16.mxu0 0
  %1694 = vmatpush1.bf16.msra.mxu0 0
  %1695 = vmatprep.subr.bf16.mxu0 0
  %1696 = vmatpush1.bf16.msra.mxu0 0
  %1697 = vmatprep.subr.bf16.mxu0 0
  %1698 = vmatpush1.bf16.msra.mxu0 0
  %1699 = vmatprep.subr.bf16.mxu0 0
  %1700 = vmatpush1.bf16.msra.mxu0 0
  %1701 = vmatprep.subr.bf16.mxu0 0
  %1702 = vmatpush1.bf16.msra.mxu0 0
  %1703 = vmatprep.mubr.bf16.mxu0 0
  %1704 = vmatmul.mubr.bf16.gmra.mrb[0].mxu0 %v1648
  %v1705 = vpop.f32.mrb[0].mxu0
  %v1706 = vadd.f32 %v1573, %v1705
  %v1707 = vpop.f32.mrb[0].mxu0
  %v1708 = vpop.f32.mrb[0].mxu0
  %v1709 = vadd.f32 %v1576, %v1708
  %v1710 = vpop.f32.mrb[0].mxu0
  %1711 = vmatprep.mubr.bf16.mxu0 0
  %1712 = vmatmul.mubr.bf16.gmra.mrb[0].mxu0 %v1651
  %v1713 = vpop.f32.mrb[0].mxu0
  %v1714 = vadd.f32 %v1581, %v1713
  %v1715 = vpop.f32.mrb[0].mxu0
  %v1716 = vpop.f32.mrb[0].mxu0
  %v1717 = vadd.f32 %v1584, %v1716
  %v1718 = vpop.f32.mrb[0].mxu0
  %1719 = vmatprep.mubr.bf16.mxu0 0
  %1720 = vmatmul.mubr.bf16.gmra.mrb[0].mxu0 %v1654
  %v1721 = vpop.f32.mrb[0].mxu0
  %v1722 = vadd.f32 %v1589, %v1721
  %v1723 = vpop.f32.mrb[0].mxu0
  %v1724 = vpop.f32.mrb[0].mxu0
  %v1725 = vadd.f32 %v1592, %v1724
  %v1726 = vpop.f32.mrb[0].mxu0
  %1727 = vmatprep.mubr.bf16.mxu0 0
  %1728 = vmatmul.mubr.bf16.gmra.mrb[0].mxu0 %v1657
  %v1729 = vpop.f32.mrb[0].mxu0
  %v1730 = vadd.f32 %v1597, %v1729
  %v1731 = vpop.f32.mrb[0].mxu0
  %v1732 = vpop.f32.mrb[0].mxu0
  %v1733 = vadd.f32 %v1600, %v1732
  %v1734 = vpop.f32.mrb[0].mxu0
  %1735 = vmatprep.mubr.bf16.mxu0 0
  %1736 = vmatmul.mubr.bf16.gmra.mrb[0].mxu0 %v1660
  %v1737 = vpop.f32.mrb[0].mxu0
  %v1738 = vadd.f32 %v1605, %v1737
  %v1739 = vpop.f32.mrb[0].mxu0
  %v1740 = vpop.f32.mrb[0].mxu0
  %v1741 = vadd.f32 %v1608, %v1740
  %v1742 = vpop.f32.mrb[0].mxu0
  %1743 = vmatprep.mubr.bf16.mxu0 0
  %1744 = vmatmul.mubr.bf16.gmra.mrb[0].mxu0 %v1663
  %v1745 = vpop.f32.mrb[0].mxu0
  %v1746 = vadd.f32 %v1613, %v1745
  %v1747 = vpop.f32.mrb[0].mxu0
  %v1748 = vpop.f32.mrb[0].mxu0
  %v1749 = vadd.f32 %v1616, %v1748
  %v1750 = vpop.f32.mrb[0].mxu0
  %1751 = vmatprep.mubr.bf16.mxu0 0
  %1752 = vmatmul.mubr.bf16.gmra.mrb[0].mxu0 %v1666
  %v1753 = vpop.f32.mrb[0].mxu0
  %v1754 = vadd.f32 %v1621, %v1753
  %v1755 = vpop.f32.mrb[0].mxu0
  %v1756 = vpop.f32.mrb[0].mxu0
  %v1757 = vadd.f32 %v1624, %v1756
  %v1758 = vpop.f32.mrb[0].mxu0
  %1759 = vmatprep.mubr.bf16.mxu0 0
  %1760 = vmatmul.mubr.bf16.gmra.mrb[0].mxu0 %v1669
  %v1761 = vpop.f32.mrb[0].mxu0
  %v1762 = vadd.f32 %v1629, %v1761
  %v1763 = vpop.f32.mrb[0].mxu0
  %v1764 = vpop.f32.mrb[0].mxu0
  %v1765 = vadd.f32 %v1632, %v1764
  %v1766 = vpop.f32.mrb[0].mxu0
  %1767 = vdwg.mxu0
  %s1768 = scalar_lea.vmem %s4, 32
  %v1769 = vld [vmem:[%s1768] sm:$0xf]
  %v1770 = vld [vmem:[%s1768 + $0x4] sm:$0xf]
  %v1771 = vld [vmem:[%s1768 + $0x8] sm:$0xf]
  %v1772 = vld [vmem:[%s1768 + $0xc] sm:$0xf]
  %v1777 = vunpack.c.l.b16 %v1769
  %v1778 = vunpack.c.l.b16 %v1770
  %v1779 = vunpack.c.l.b16 %v1771
  %v1780 = vunpack.c.l.b16 %v1772
  %v1781 = vpack.c.b16 %v1778, %v1777
  %v1782 = vpack.c.b16 %v1780, %v1779
  %v1786 = vsel %vm615, %v1477, 0
  %v1789 = vsel %vm615, %v1478, 0
  %v1792 = vsel %vm615, %v1479, 0
  %v1795 = vsel %vm615, %v1480, 0
  %v1798 = vsel %vm615, %v1481, 0
  %v1801 = vsel %vm615, %v1482, 0
  %v1804 = vsel %vm615, %v1483, 0
  %v1807 = vsel %vm615, %v1484, 0
  %1809 = vmatprep.subr.bf16.mxu0 0
  %1810 = vmatpush1.bf16.msra.mxu0 %v1781
  %1811 = vmatprep.subr.bf16.mxu0 0
  %1812 = vmatpush1.bf16.msra.mxu0 %v1782
  %1813 = vmatprep.subr.bf16.mxu0 0
  %1814 = vmatpush1.bf16.msra.mxu0 0
  %1815 = vmatprep.subr.bf16.mxu0 0
  %1816 = vmatpush1.bf16.msra.mxu0 0
  %1817 = vmatprep.subr.bf16.mxu0 0
  %1818 = vmatpush1.bf16.msra.mxu0 0
  %1819 = vmatprep.subr.bf16.mxu0 0
  %1820 = vmatpush1.bf16.msra.mxu0 0
  %1821 = vmatprep.subr.bf16.mxu0 0
  %1822 = vmatpush1.bf16.msra.mxu0 0
  %1823 = vmatprep.subr.bf16.mxu0 0
  %1824 = vmatpush1.bf16.msra.mxu0 0
  %1825 = vmatprep.subr.bf16.mxu0 0
  %1826 = vmatpush1.bf16.msra.mxu0 0
  %1827 = vmatprep.subr.bf16.mxu0 0
  %1828 = vmatpush1.bf16.msra.mxu0 0
  %1829 = vmatprep.subr.bf16.mxu0 0
  %1830 = vmatpush1.bf16.msra.mxu0 0
  %1831 = vmatprep.subr.bf16.mxu0 0
  %1832 = vmatpush1.bf16.msra.mxu0 0
  %1833 = vmatprep.subr.bf16.mxu0 0
  %1834 = vmatpush1.bf16.msra.mxu0 0
  %1835 = vmatprep.subr.bf16.mxu0 0
  %1836 = vmatpush1.bf16.msra.mxu0 0
  %1837 = vmatprep.subr.bf16.mxu0 0
  %1838 = vmatpush1.bf16.msra.mxu0 0
  %1839 = vmatprep.subr.bf16.mxu0 0
  %1840 = vmatpush1.bf16.msra.mxu0 0
  %1841 = vmatprep.mubr.bf16.mxu0 0
  %1842 = vmatmul.mubr.bf16.gmra.mrb[0].mxu0 %v1786
  %v1843 = vpop.f32.mrb[0].mxu0
  %v1844 = vadd.f32 0.0, %v1843
  %v1845 = vpop.f32.mrb[0].mxu0
  %v1846 = vpop.f32.mrb[0].mxu0
  %v1847 = vadd.f32 0.0, %v1846
  %v1848 = vpop.f32.mrb[0].mxu0
  %1849 = vmatprep.mubr.bf16.mxu0 0
  %1850 = vmatmul.mubr.bf16.gmra.mrb[0].mxu0 %v1789
  %v1851 = vpop.f32.mrb[0].mxu0
  %v1852 = vadd.f32 0.0, %v1851
  %v1853 = vpop.f32.mrb[0].mxu0
  %v1854 = vpop.f32.mrb[0].mxu0
  %v1855 = vadd.f32 0.0, %v1854
  %v1856 = vpop.f32.mrb[0].mxu0
  %1857 = vmatprep.mubr.bf16.mxu0 0
  %1858 = vmatmul.mubr.bf16.gmra.mrb[0].mxu0 %v1792
  %v1859 = vpop.f32.mrb[0].mxu0
  %v1860 = vadd.f32 0.0, %v1859
  %v1861 = vpop.f32.mrb[0].mxu0
  %v1862 = vpop.f32.mrb[0].mxu0
  %v1863 = vadd.f32 0.0, %v1862
  %v1864 = vpop.f32.mrb[0].mxu0
  %1865 = vmatprep.mubr.bf16.mxu0 0
  %1866 = vmatmul.mubr.bf16.gmra.mrb[0].mxu0 %v1795
  %v1867 = vpop.f32.mrb[0].mxu0
  %v1868 = vadd.f32 0.0, %v1867
  %v1869 = vpop.f32.mrb[0].mxu0
  %v1870 = vpop.f32.mrb[0].mxu0
  %v1871 = vadd.f32 0.0, %v1870
  %v1872 = vpop.f32.mrb[0].mxu0
  %1873 = vmatprep.mubr.bf16.mxu0 0
  %1874 = vmatmul.mubr.bf16.gmra.mrb[0].mxu0 %v1798
  %v1875 = vpop.f32.mrb[0].mxu0
  %v1876 = vadd.f32 0.0, %v1875
  %v1877 = vpop.f32.mrb[0].mxu0
  %v1878 = vpop.f32.mrb[0].mxu0
  %v1879 = vadd.f32 0.0, %v1878
  %v1880 = vpop.f32.mrb[0].mxu0
  %1881 = vmatprep.mubr.bf16.mxu0 0
  %1882 = vmatmul.mubr.bf16.gmra.mrb[0].mxu0 %v1801
  %v1883 = vpop.f32.mrb[0].mxu0
  %v1884 = vadd.f32 0.0, %v1883
  %v1885 = vpop.f32.mrb[0].mxu0
  %v1886 = vpop.f32.mrb[0].mxu0
  %v1887 = vadd.f32 0.0, %v1886
  %v1888 = vpop.f32.mrb[0].mxu0
  %1889 = vmatprep.mubr.bf16.mxu0 0
  %1890 = vmatmul.mubr.bf16.gmra.mrb[0].mxu0 %v1804
  %v1891 = vpop.f32.mrb[0].mxu0
  %v1892 = vadd.f32 0.0, %v1891
  %v1893 = vpop.f32.mrb[0].mxu0
  %v1894 = vpop.f32.mrb[0].mxu0
  %v1895 = vadd.f32 0.0, %v1894
  %v1896 = vpop.f32.mrb[0].mxu0
  %1897 = vmatprep.mubr.bf16.mxu0 0
  %1898 = vmatmul.mubr.bf16.gmra.mrb[0].mxu0 %v1807
  %v1899 = vpop.f32.mrb[0].mxu0
  %v1900 = vadd.f32 0.0, %v1899
  %v1901 = vpop.f32.mrb[0].mxu0
  %v1902 = vpop.f32.mrb[0].mxu0
  %v1903 = vadd.f32 0.0, %v1902
  %v1904 = vpop.f32.mrb[0].mxu0
  %1905 = vdwg.mxu0
  %v1906 = vadd.f32 %v1706, %v1844
  %v1907 = vadd.f32 %v1709, %v1847
  %v1908 = vadd.f32 %v1714, %v1852
  %v1909 = vadd.f32 %v1717, %v1855
  %v1910 = vadd.f32 %v1722, %v1860
  %v1911 = vadd.f32 %v1725, %v1863
  %v1912 = vadd.f32 %v1730, %v1868
  %v1913 = vadd.f32 %v1733, %v1871
  %v1914 = vadd.f32 %v1738, %v1876
  %v1915 = vadd.f32 %v1741, %v1879
  %v1916 = vadd.f32 %v1746, %v1884
  %v1917 = vadd.f32 %v1749, %v1887
  %v1918 = vadd.f32 %v1754, %v1892
  %v1919 = vadd.f32 %v1757, %v1895
  %v1920 = vadd.f32 %v1762, %v1900
  %v1921 = vadd.f32 %v1765, %v1903
  %s1922 = scalar_lea.vmem %s4, 48
  %v1923 = vld [vmem:[%s1922] sm:$0xf]
  %v1924 = vld [vmem:[%s1922 + $0x4] sm:$0xf]
  %v1925 = vld [vmem:[%s1922 + $0x8] sm:$0xf]
  %v1926 = vld [vmem:[%s1922 + $0xc] sm:$0xf]
  %v1931 = vunpack.c.l.b16 %v1923
  %v1932 = vunpack.c.l.b16 %v1924
  %v1933 = vunpack.c.l.b16 %v1925
  %v1934 = vunpack.c.l.b16 %v1926
  %v1935 = vpack.c.b16 %v1932, %v1931
  %v1936 = vpack.c.b16 %v1934, %v1933
  %v1940 = vsel %vm615, %v1485, 0
  %v1943 = vsel %vm615, %v1486, 0
  %v1946 = vsel %vm615, %v1487, 0
  %v1949 = vsel %vm615, %v1488, 0
  %v1952 = vsel %vm615, %v1489, 0
  %v1955 = vsel %vm615, %v1490, 0
  %v1958 = vsel %vm615, %v1491, 0
  %v1961 = vsel %vm615, %v1492, 0
  %1963 = vmatprep.subr.bf16.mxu0 0
  %1964 = vmatpush1.bf16.msra.mxu0 %v1935
  %1965 = vmatprep.subr.bf16.mxu0 0
  %1966 = vmatpush1.bf16.msra.mxu0 %v1936
  %1967 = vmatprep.subr.bf16.mxu0 0
  %1968 = vmatpush1.bf16.msra.mxu0 0
  %1969 = vmatprep.subr.bf16.mxu0 0
  %1970 = vmatpush1.bf16.msra.mxu0 0
  %1971 = vmatprep.subr.bf16.mxu0 0
  %1972 = vmatpush1.bf16.msra.mxu0 0
  %1973 = vmatprep.subr.bf16.mxu0 0
  %1974 = vmatpush1.bf16.msra.mxu0 0
  %1975 = vmatprep.subr.bf16.mxu0 0
  %1976 = vmatpush1.bf16.msra.mxu0 0
  %1977 = vmatprep.subr.bf16.mxu0 0
  %1978 = vmatpush1.bf16.msra.mxu0 0
  %1979 = vmatprep.subr.bf16.mxu0 0
  %1980 = vmatpush1.bf16.msra.mxu0 0
  %1981 = vmatprep.subr.bf16.mxu0 0
  %1982 = vmatpush1.bf16.msra.mxu0 0
  %1983 = vmatprep.subr.bf16.mxu0 0
  %1984 = vmatpush1.bf16.msra.mxu0 0
  %1985 = vmatprep.subr.bf16.mxu0 0
  %1986 = vmatpush1.bf16.msra.mxu0 0
  %1987 = vmatprep.subr.bf16.mxu0 0
  %1988 = vmatpush1.bf16.msra.mxu0 0
  %1989 = vmatprep.subr.bf16.mxu0 0
  %1990 = vmatpush1.bf16.msra.mxu0 0
  %1991 = vmatprep.subr.bf16.mxu0 0
  %1992 = vmatpush1.bf16.msra.mxu0 0
  %1993 = vmatprep.subr.bf16.mxu0 0
  %1994 = vmatpush1.bf16.msra.mxu0 0
  %1995 = vmatprep.mubr.bf16.mxu0 0
  %1996 = vmatmul.mubr.bf16.gmra.mrb[0].mxu0 %v1940
  %v1997 = vpop.f32.mrb[0].mxu0
  %v1998 = vadd.f32 0.0, %v1997
  %v1999 = vpop.f32.mrb[0].mxu0
  %v2000 = vpop.f32.mrb[0].mxu0
  %v2001 = vadd.f32 0.0, %v2000
  %v2002 = vpop.f32.mrb[0].mxu0
  %2003 = vmatprep.mubr.bf16.mxu0 0
  %2004 = vmatmul.mubr.bf16.gmra.mrb[0].mxu0 %v1943
  %v2005 = vpop.f32.mrb[0].mxu0
  %v2006 = vadd.f32 0.0, %v2005
  %v2007 = vpop.f32.mrb[0].mxu0
  %v2008 = vpop.f32.mrb[0].mxu0
  %v2009 = vadd.f32 0.0, %v2008
  %v2010 = vpop.f32.mrb[0].mxu0
  %2011 = vmatprep.mubr.bf16.mxu0 0
  %2012 = vmatmul.mubr.bf16.gmra.mrb[0].mxu0 %v1946
  %v2013 = vpop.f32.mrb[0].mxu0
  %v2014 = vadd.f32 0.0, %v2013
  %v2015 = vpop.f32.mrb[0].mxu0
  %v2016 = vpop.f32.mrb[0].mxu0
  %v2017 = vadd.f32 0.0, %v2016
  %v2018 = vpop.f32.mrb[0].mxu0
  %2019 = vmatprep.mubr.bf16.mxu0 0
  %2020 = vmatmul.mubr.bf16.gmra.mrb[0].mxu0 %v1949
  %v2021 = vpop.f32.mrb[0].mxu0
  %v2022 = vadd.f32 0.0, %v2021
  %v2023 = vpop.f32.mrb[0].mxu0
  %v2024 = vpop.f32.mrb[0].mxu0
  %v2025 = vadd.f32 0.0, %v2024
  %v2026 = vpop.f32.mrb[0].mxu0
  %2027 = vmatprep.mubr.bf16.mxu0 0
  %2028 = vmatmul.mubr.bf16.gmra.mrb[0].mxu0 %v1952
  %v2029 = vpop.f32.mrb[0].mxu0
  %v2030 = vadd.f32 0.0, %v2029
  %v2031 = vpop.f32.mrb[0].mxu0
  %v2032 = vpop.f32.mrb[0].mxu0
  %v2033 = vadd.f32 0.0, %v2032
  %v2034 = vpop.f32.mrb[0].mxu0
  %2035 = vmatprep.mubr.bf16.mxu0 0
  %2036 = vmatmul.mubr.bf16.gmra.mrb[0].mxu0 %v1955
  %v2037 = vpop.f32.mrb[0].mxu0
  %v2038 = vadd.f32 0.0, %v2037
  %v2039 = vpop.f32.mrb[0].mxu0
  %v2040 = vpop.f32.mrb[0].mxu0
  %v2041 = vadd.f32 0.0, %v2040
  %v2042 = vpop.f32.mrb[0].mxu0
  %2043 = vmatprep.mubr.bf16.mxu0 0
  %2044 = vmatmul.mubr.bf16.gmra.mrb[0].mxu0 %v1958
  %v2045 = vpop.f32.mrb[0].mxu0
  %v2046 = vadd.f32 0.0, %v2045
  %v2047 = vpop.f32.mrb[0].mxu0
  %v2048 = vpop.f32.mrb[0].mxu0
  %v2049 = vadd.f32 0.0, %v2048
  %v2050 = vpop.f32.mrb[0].mxu0
  %2051 = vmatprep.mubr.bf16.mxu0 0
  %2052 = vmatmul.mubr.bf16.gmra.mrb[0].mxu0 %v1961
  %v2053 = vpop.f32.mrb[0].mxu0
  %v2054 = vadd.f32 0.0, %v2053
  %v2055 = vpop.f32.mrb[0].mxu0
  %v2056 = vpop.f32.mrb[0].mxu0
  %v2057 = vadd.f32 0.0, %v2056
  %v2058 = vpop.f32.mrb[0].mxu0
  %2059 = vdwg.mxu0
  %v2060 = vadd.f32 %v1906, %v1998
  %v2061 = vadd.f32 %v1907, %v2001
  %v2062 = vadd.f32 %v1908, %v2006
  %v2063 = vadd.f32 %v1909, %v2009
  %v2064 = vadd.f32 %v1910, %v2014
  %v2065 = vadd.f32 %v1911, %v2017
  %v2066 = vadd.f32 %v1912, %v2022
  %v2067 = vadd.f32 %v1913, %v2025
  %v2068 = vadd.f32 %v1914, %v2030
  %v2069 = vadd.f32 %v1915, %v2033
  %v2070 = vadd.f32 %v1916, %v2038
  %v2071 = vadd.f32 %v1917, %v2041
  %v2072 = vadd.f32 %v1918, %v2046
  %v2073 = vadd.f32 %v1919, %v2049
  %v2074 = vadd.f32 %v1920, %v2054
  %v2075 = vadd.f32 %v1921, %v2057
  %v2076 = vmax.f32 %v2060, 0.0
  %v2077 = vmax.f32 %v2061, 0.0
  %v2078 = vmax.f32 %v2062, 0.0
  %v2079 = vmax.f32 %v2063, 0.0
  %v2080 = vmax.f32 %v2064, 0.0
  %v2081 = vmax.f32 %v2065, 0.0
  %v2082 = vmax.f32 %v2066, 0.0
  %v2083 = vmax.f32 %v2067, 0.0
  %v2084 = vmax.f32 %v2068, 0.0
  %v2085 = vmax.f32 %v2069, 0.0
  %v2086 = vmax.f32 %v2070, 0.0
  %v2087 = vmax.f32 %v2071, 0.0
  %v2088 = vmax.f32 %v2072, 0.0
  %v2089 = vmax.f32 %v2073, 0.0
  %v2090 = vmax.f32 %v2074, 0.0
  %v2091 = vmax.f32 %v2075, 0.0
  %v2092 = vpack.c.bf16 %v2077, %v2076
  %v2093 = vpack.c.bf16 %v2079, %v2078
  %v2094 = vpack.c.bf16 %v2081, %v2080
  %v2095 = vpack.c.bf16 %v2083, %v2082
  %v2096 = vpack.c.bf16 %v2085, %v2084
  %v2097 = vpack.c.bf16 %v2087, %v2086
  %v2098 = vpack.c.bf16 %v2089, %v2088
  %v2099 = vpack.c.bf16 %v2091, %v2090
  %v2100 = vld [vmem:[%s5] sm:$0xf]
  %v2101 = vld [vmem:[%s5 + $0x4] sm:$0xf]
  %v2102 = vld [vmem:[%s5 + $0x8] sm:$0xf]
  %v2103 = vld [vmem:[%s5 + $0xc] sm:$0xf]
  %v2104 = vld [vmem:[%s5 + $0x10] sm:$0xf]
  %v2105 = vld [vmem:[%s5 + $0x14] sm:$0xf]
  %v2106 = vld [vmem:[%s5 + $0x18] sm:$0xf]
  %v2107 = vld [vmem:[%s5 + $0x1c] sm:$0xf]
  %v2108 = vld [vmem:[%s5 + $0x20] sm:$0xf]
  %v2109 = vld [vmem:[%s5 + $0x24] sm:$0xf]
  %v2110 = vld [vmem:[%s5 + $0x28] sm:$0xf]
  %v2111 = vld [vmem:[%s5 + $0x2c] sm:$0xf]
  %v2112 = vld [vmem:[%s5 + $0x30] sm:$0xf]
  %v2113 = vld [vmem:[%s5 + $0x34] sm:$0xf]
  %v2114 = vld [vmem:[%s5 + $0x38] sm:$0xf]
  %v2115 = vld [vmem:[%s5 + $0x3c] sm:$0xf]
  %v2132 = vunpack.c.l.b16 %v2100
  %v2133 = vunpack.c.l.b16 %v2101
  %v2134 = vunpack.c.l.b16 %v2102
  %v2135 = vunpack.c.l.b16 %v2103
  %v2136 = vunpack.c.l.b16 %v2104
  %v2137 = vunpack.c.l.b16 %v2105
  %v2138 = vunpack.c.l.b16 %v2106
  %v2139 = vunpack.c.l.b16 %v2107
  %v2140 = vunpack.c.l.b16 %v2108
  %v2141 = vunpack.c.l.b16 %v2109
  %v2142 = vunpack.c.l.b16 %v2110
  %v2143 = vunpack.c.l.b16 %v2111
  %v2144 = vunpack.c.l.b16 %v2112
  %v2145 = vunpack.c.l.b16 %v2113
  %v2146 = vunpack.c.l.b16 %v2114
  %v2147 = vunpack.c.l.b16 %v2115
  %v2148 = vpack.c.b16 %v2133, %v2132
  %v2149 = vpack.c.b16 %v2135, %v2134
  %v2150 = vpack.c.b16 %v2137, %v2136
  %v2151 = vpack.c.b16 %v2139, %v2138
  %v2152 = vpack.c.b16 %v2141, %v2140
  %v2153 = vpack.c.b16 %v2143, %v2142
  %v2154 = vpack.c.b16 %v2145, %v2144
  %v2155 = vpack.c.b16 %v2147, %v2146
  %2164 = vmatprep.subr.bf16.mxu0 0
  %2165 = vmatpush1.bf16.msra.mxu0 %v2148
  %2166 = vmatprep.subr.bf16.mxu0 0
  %2167 = vmatpush1.bf16.msra.mxu0 %v2149
  %2168 = vmatprep.subr.bf16.mxu0 0
  %2169 = vmatpush1.bf16.msra.mxu0 %v2150
  %2170 = vmatprep.subr.bf16.mxu0 0
  %2171 = vmatpush1.bf16.msra.mxu0 %v2151
  %2172 = vmatprep.subr.bf16.mxu0 0
  %2173 = vmatpush1.bf16.msra.mxu0 %v2152
  %2174 = vmatprep.subr.bf16.mxu0 0
  %2175 = vmatpush1.bf16.msra.mxu0 %v2153
  %2176 = vmatprep.subr.bf16.mxu0 0
  %2177 = vmatpush1.bf16.msra.mxu0 %v2154
  %2178 = vmatprep.subr.bf16.mxu0 0
  %2179 = vmatpush1.bf16.msra.mxu0 %v2155
  %2180 = vmatprep.subr.bf16.mxu0 0
  %2181 = vmatpush1.bf16.msra.mxu0 0
  %2182 = vmatprep.subr.bf16.mxu0 0
  %2183 = vmatpush1.bf16.msra.mxu0 0
  %2184 = vmatprep.subr.bf16.mxu0 0
  %2185 = vmatpush1.bf16.msra.mxu0 0
  %2186 = vmatprep.subr.bf16.mxu0 0
  %2187 = vmatpush1.bf16.msra.mxu0 0
  %2188 = vmatprep.subr.bf16.mxu0 0
  %2189 = vmatpush1.bf16.msra.mxu0 0
  %2190 = vmatprep.subr.bf16.mxu0 0
  %2191 = vmatpush1.bf16.msra.mxu0 0
  %2192 = vmatprep.subr.bf16.mxu0 0
  %2193 = vmatpush1.bf16.msra.mxu0 0
  %2194 = vmatprep.subr.bf16.mxu0 0
  %2195 = vmatpush1.bf16.msra.mxu0 0
  %2196 = vmatprep.mubr.bf16.mxu0 0
  %2197 = vmatmul.mubr.bf16.gmra.mrb[0].mxu0 %v2092
  %v2198 = vpop.f32.mrb[0].mxu0
  %v2199 = vadd.f32 0.0, %v2198
  %v2200 = vpop.f32.mrb[0].mxu0
  %v2201 = vpop.f32.mrb[0].mxu0
  %v2202 = vadd.f32 0.0, %v2201
  %v2203 = vpop.f32.mrb[0].mxu0
  %2204 = vmatprep.mubr.bf16.mxu0 0
  %2205 = vmatmul.mubr.bf16.gmra.mrb[0].mxu0 %v2093
  %v2206 = vpop.f32.mrb[0].mxu0
  %v2207 = vadd.f32 0.0, %v2206
  %v2208 = vpop.f32.mrb[0].mxu0
  %v2209 = vpop.f32.mrb[0].mxu0
  %v2210 = vadd.f32 0.0, %v2209
  %v2211 = vpop.f32.mrb[0].mxu0
  %2212 = vmatprep.mubr.bf16.mxu0 0
  %2213 = vmatmul.mubr.bf16.gmra.mrb[0].mxu0 %v2094
  %v2214 = vpop.f32.mrb[0].mxu0
  %v2215 = vadd.f32 0.0, %v2214
  %v2216 = vpop.f32.mrb[0].mxu0
  %v2217 = vpop.f32.mrb[0].mxu0
  %v2218 = vadd.f32 0.0, %v2217
  %v2219 = vpop.f32.mrb[0].mxu0
  %2220 = vmatprep.mubr.bf16.mxu0 0
  %2221 = vmatmul.mubr.bf16.gmra.mrb[0].mxu0 %v2095
  %v2222 = vpop.f32.mrb[0].mxu0
  %v2223 = vadd.f32 0.0, %v2222
  %v2224 = vpop.f32.mrb[0].mxu0
  %v2225 = vpop.f32.mrb[0].mxu0
  %v2226 = vadd.f32 0.0, %v2225
  %v2227 = vpop.f32.mrb[0].mxu0
  %2228 = vmatprep.mubr.bf16.mxu0 0
  %2229 = vmatmul.mubr.bf16.gmra.mrb[0].mxu0 %v2096
  %v2230 = vpop.f32.mrb[0].mxu0
  %v2231 = vadd.f32 0.0, %v2230
  %v2232 = vpop.f32.mrb[0].mxu0
  %v2233 = vpop.f32.mrb[0].mxu0
  %v2234 = vadd.f32 0.0, %v2233
  %v2235 = vpop.f32.mrb[0].mxu0
  %2236 = vmatprep.mubr.bf16.mxu0 0
  %2237 = vmatmul.mubr.bf16.gmra.mrb[0].mxu0 %v2097
  %v2238 = vpop.f32.mrb[0].mxu0
  %v2239 = vadd.f32 0.0, %v2238
  %v2240 = vpop.f32.mrb[0].mxu0
  %v2241 = vpop.f32.mrb[0].mxu0
  %v2242 = vadd.f32 0.0, %v2241
  %v2243 = vpop.f32.mrb[0].mxu0
  %2244 = vmatprep.mubr.bf16.mxu0 0
  %2245 = vmatmul.mubr.bf16.gmra.mrb[0].mxu0 %v2098
  %v2246 = vpop.f32.mrb[0].mxu0
  %v2247 = vadd.f32 0.0, %v2246
  %v2248 = vpop.f32.mrb[0].mxu0
  %v2249 = vpop.f32.mrb[0].mxu0
  %v2250 = vadd.f32 0.0, %v2249
  %v2251 = vpop.f32.mrb[0].mxu0
  %2252 = vmatprep.mubr.bf16.mxu0 0
  %2253 = vmatmul.mubr.bf16.gmra.mrb[0].mxu0 %v2099
  %v2254 = vpop.f32.mrb[0].mxu0
  %v2255 = vadd.f32 0.0, %v2254
  %v2256 = vpop.f32.mrb[0].mxu0
  %v2257 = vpop.f32.mrb[0].mxu0
  %v2258 = vadd.f32 0.0, %v2257
  %v2259 = vpop.f32.mrb[0].mxu0
  %2260 = vdwg.mxu0
  %v2261 = vtanh.pop %v2199
  %v2262 = vtanh.pop %v2202
  %v2263 = vtanh.pop %v2207
  %v2264 = vtanh.pop %v2210
  %v2265 = vtanh.pop %v2215
  %v2266 = vtanh.pop %v2218
  %v2267 = vtanh.pop %v2223
  %v2268 = vtanh.pop %v2226
  %v2269 = vtanh.pop %v2231
  %v2270 = vtanh.pop %v2234
  %v2271 = vtanh.pop %v2239
  %v2272 = vtanh.pop %v2242
  %v2273 = vtanh.pop %v2247
  %v2274 = vtanh.pop %v2250
  %v2275 = vtanh.pop %v2255
  %v2276 = vtanh.pop %v2258
  %2277 = vst [vmem:[%s6] sm:$0xff] %v2261
  %2278 = vst [vmem:[%s6 + $0x8] sm:$0xff] %v2262
  %2279 = vst [vmem:[%s6 + $0x10] sm:$0xff] %v2263
  %2280 = vst [vmem:[%s6 + $0x18] sm:$0xff] %v2264
  %2281 = vst [vmem:[%s6 + $0x20] sm:$0xff] %v2265
  %2282 = vst [vmem:[%s6 + $0x28] sm:$0xff] %v2266
  %2283 = vst [vmem:[%s6 + $0x30] sm:$0xff] %v2267
  %2284 = vst [vmem:[%s6 + $0x38] sm:$0xff] %v2268
  %2285 = vst [vmem:[%s6 + $0x40] sm:$0xff] %v2269
  %2286 = vst [vmem:[%s6 + $0x48] sm:$0xff] %v2270
  %2287 = vst [vmem:[%s6 + $0x50] sm:$0xff] %v2271
  %2288 = vst [vmem:[%s6 + $0x58] sm:$0xff] %v2272
  %2289 = vst [vmem:[%s6 + $0x60] sm:$0xff] %v2273
  %2290 = vst [vmem:[%s6 + $0x68] sm:$0xff] %v2274
  %2291 = vst [vmem:[%s6 + $0x70] sm:$0xff] %v2275
  %2292 = vst [vmem:[%s6 + $0x78] sm:$0xff] %v2276
  // Predicated region
  $region26: #{generator_forward.1} parent=0 // pred_check
    _
  $region27: #{generator_forward.1} parent=0 // pred_check_branch
    %2294 = sbr.rel (0) target = $region29
  $region28: #{generator_forward.1} parent=0 // pred_region
    _
  $region29: #{generator_forward.1} parent=0 // pred_fallthru
    _
  // Predicated region
  $region30: #{generator_forward.1} parent=0 // pred_check
    _
  $region31: #{generator_forward.1} parent=0 // pred_check_branch
    %2296 = sbr.rel (0) target = $region33
  $region32: #{generator_forward.1} parent=0 // pred_region
    _
  $region33: #{generator_forward.1} parent=0 // pred_fallthru
    _

</llo_original>
